<compile_context>
chip_gen: v6e
topology: v6e:2x2x1
jax: 0.10.0
libtpu: 0.0.40
codegen_flags: <defaults>
</compile_context>

<pallas_src>
import jax
import jax.numpy as jnp
from jax.experimental import pallas as pl
from jax.experimental.pallas import tpu as pltpu


def _attn_kernel(c1_ref, a7t_ref, g6_ref, f5t_ref, out_ref):
    # Per-block shapes:
    #   c1_ref : (B, tm, K)
    #   a7t_ref: (B, K,  N)   -- A7 pre-transposed in the wrapper
    #   g6_ref : (B, N,  P)
    #   f5t_ref: (B, P, tq)   -- F5 pre-transposed in the wrapper
    #   out_ref: (B, tm, tq)
    c1 = c1_ref[...]
    a7t = a7t_ref[...]
    g6 = g6_ref[...]
    f5t = f5t_ref[...]

    # E1 = bmm(C1, A7^T) -> (B, tm, N)   (standard contraction, no in-kernel transpose)
    e1 = jnp.einsum('bmk,bkn->bmn', c1, a7t,
                    preferred_element_type=jnp.float32)
    # J1 = bmm(G6, F5^T) -> (B, N, tq)
    j1 = jnp.einsum('bnp,bpq->bnq', g6, f5t,
                    preferred_element_type=jnp.float32)
    # E2 = bmm(E1, J1)   -> (B, tm, tq)
    e2 = jnp.einsum('bmn,bnq->bmq', e1, j1,
                    preferred_element_type=jnp.float32)

    # softmax over dim 0 (the batch axis) -- the full B lives inside each block,
    # so this reduction is entirely local. Keep it in f32 (v5e has no bf16 VPU/EUP).
    m = jnp.max(e2, axis=0, keepdims=True)
    p = jnp.exp(e2 - m)
    denom = jnp.sum(p, axis=0, keepdims=True)
    out_ref[...] = (p * pl.reciprocal(denom, approx=True)).astype(out_ref.dtype)


def _pick_tile(dim, preferred=128):
    """Largest lane/sublane-friendly tile: 128 if it divides dim, else the full dim."""
    return preferred if dim % preferred == 0 else dim


@jax.jit
def model_forward(A7, C1, F5, G6):
    B, N, K = A7.shape
    Bc, M, Kc = C1.shape
    Bf, Q, P = F5.shape
    assert (Bc, Kc) == (B, K)
    assert Bf == B
    assert G6.shape == (B, N, P)

    # Wrapper-side (HBM/XLA) transposes: avoids per-batch XLU transposes in-kernel.
    A7t = jnp.swapaxes(A7, -2, -1)  # (B, K, N)
    F5t = jnp.swapaxes(F5, -2, -1)  # (B, P, Q)

    tm = _pick_tile(M)
    tq = _pick_tile(Q)
    grid = (M // tm, Q // tq)

    flops = 2 * B * (M * K * N + N * P * Q + M * N * Q)
    bytes_accessed = 4 * (A7.size + C1.size + F5.size + G6.size + B * M * Q)
    cost = pl.CostEstimate(flops=flops,
                           transcendentals=B * M * Q,
                           bytes_accessed=bytes_accessed)

    return pl.pallas_call(
        _attn_kernel,
        out_shape=jax.ShapeDtypeStruct((B, M, Q), jnp.float32),
        grid=grid,
        in_specs=[
            pl.BlockSpec((B, tm, K), lambda i, j: (0, i, 0)),   # C1 tile along M
            pl.BlockSpec((B, K, N), lambda i, j: (0, 0, 0)),    # A7^T, whole
            pl.BlockSpec((B, N, P), lambda i, j: (0, 0, 0)),    # G6, whole
            pl.BlockSpec((B, P, tq), lambda i, j: (0, 0, j)),   # F5^T tile along Q
        ],
        out_specs=pl.BlockSpec((B, tm, tq), lambda i, j: (0, i, j)),
        compiler_params=pltpu.CompilerParams(
            dimension_semantics=("parallel", "parallel"),
            vmem_limit_bytes=32 * 1024 * 1024,   # safe on v5e/v6e/v7x
        ),
        cost_estimate=cost,
    )(C1, A7t, G6, F5t)


def model_forward_ref(A7, C1, F5, G6):
    e1 = jnp.einsum('bmk,bnk->bmn', C1, A7)
    j1 = jnp.einsum('bnp,bqp->bnq', G6, F5)
    e2 = jnp.einsum('bmn,bnq->bmq', e1, j1)
    return jax.nn.softmax(e2, axis=0)


if __name__ == "__main__":
    key = jax.random.PRNGKey(0)
    k1, k2, k3, k4 = jax.random.split(key, 4)

    # MXU/lane-friendly (but still small) shapes; exercises a 2x2 parallel grid.
    B, M, N, Q, K, P = 2, 256, 128, 256, 128, 128
    scale = 0.2  # keep E2 magnitudes moderate so the cross-batch softmax is well-conditioned
    A7 = scale * jax.random.normal(k1, (B, N, K), dtype=jnp.float32)
    C1 = scale * jax.random.normal(k2, (B, M, K), dtype=jnp.float32)
    F5 = scale * jax.random.normal(k3, (B, Q, P), dtype=jnp.float32)
    G6 = scale * jax.random.normal(k4, (B, N, P), dtype=jnp.float32)

    out = model_forward(A7, C1, F5, G6)
    out = jax.block_until_ready(out)

    ref = model_forward_ref(A7, C1, F5, G6)
    assert out.shape == (B, M, Q)
    # tolerance absorbs the approximate (EUP) reciprocal in the softmax denom
    assert jnp.allclose(out, ref, atol=2e-3, rtol=2e-3)

    print("KERNEL_OK")
</pallas_src>

<mosaic_0001>
module attributes {stable_mosaic.version = 11 : i64} {
  func.func @_attn_kernel(%arg0: i32, %arg1: i32, %arg2: memref<2x128x128xf32, #tpu.memory_space<vmem>>, %arg3: memref<2x128x128xf32, #tpu.memory_space<vmem>>, %arg4: memref<2x128x128xf32, #tpu.memory_space<vmem>>, %arg5: memref<2x128x128xf32, #tpu.memory_space<vmem>>, %arg6: memref<2x128x128xf32, #tpu.memory_space<vmem>>) attributes {dimension_semantics = [#tpu.dimension_semantics<parallel>, #tpu.dimension_semantics<parallel>], iteration_bounds = array<i64: 2, 2>, scalar_prefetch = 0 : i64, scratch_operands = 0 : i64, tpu.core_type = #tpu.core_type<tc>, window_params = [{transform_indices = @transform_0, window_bounds = array<i64: 2, 128, 128>}, {pipeline_mode = #tpu.pipeline_mode<synchronous>, transform_indices = @transform_1, window_bounds = array<i64: 2, 128, 128>}, {pipeline_mode = #tpu.pipeline_mode<synchronous>, transform_indices = @transform_2, window_bounds = array<i64: 2, 128, 128>}, {transform_indices = @transform_3, window_bounds = array<i64: 2, 128, 128>}, {transform_indices = @transform_4, window_bounds = array<i64: 2, 128, 128>}]} {
    %c0 = arith.constant 0 : index
    %c0_0 = arith.constant 0 : index
    %c0_1 = arith.constant 0 : index
    %0 = vector.load %arg2[%c0, %c0_0, %c0_1] : memref<2x128x128xf32, #tpu.memory_space<vmem>>, vector<2x128x128xf32>
    %c0_2 = arith.constant 0 : index
    %c0_3 = arith.constant 0 : index
    %c0_4 = arith.constant 0 : index
    %1 = vector.load %arg3[%c0_2, %c0_3, %c0_4] : memref<2x128x128xf32, #tpu.memory_space<vmem>>, vector<2x128x128xf32>
    %c0_5 = arith.constant 0 : index
    %c0_6 = arith.constant 0 : index
    %c0_7 = arith.constant 0 : index
    %2 = vector.load %arg4[%c0_5, %c0_6, %c0_7] : memref<2x128x128xf32, #tpu.memory_space<vmem>>, vector<2x128x128xf32>
    %c0_8 = arith.constant 0 : index
    %c0_9 = arith.constant 0 : index
    %c0_10 = arith.constant 0 : index
    %3 = vector.load %arg5[%c0_8, %c0_9, %c0_10] : memref<2x128x128xf32, #tpu.memory_space<vmem>>, vector<2x128x128xf32>
    "tpu.trace_start"() <{level = 10 : i32, message = "bmk,bkn->bmn"}> : () -> ()
    %cst = arith.constant dense<0.000000e+00> : vector<2x128x128xf32>
    %4 = tpu.matmul %0, %1, %cst {dimension_numbers = #tpu.dot_dimension_numbers<[2], [1], [1], [2], [0, 0, 0, 1, 1, 2], [0], [0]>} : vector<2x128x128xf32>, vector<2x128x128xf32>, vector<2x128x128xf32> -> vector<2x128x128xf32>
    "tpu.trace_stop"() : () -> ()
    "tpu.trace_start"() <{level = 10 : i32, message = "bnp,bpq->bnq"}> : () -> ()
    %cst_11 = arith.constant dense<0.000000e+00> : vector<2x128x128xf32>
    %5 = tpu.matmul %2, %3, %cst_11 {dimension_numbers = #tpu.dot_dimension_numbers<[2], [1], [1], [2], [0, 0, 0, 1, 1, 2], [0], [0]>} : vector<2x128x128xf32>, vector<2x128x128xf32>, vector<2x128x128xf32> -> vector<2x128x128xf32>
    "tpu.trace_stop"() : () -> ()
    "tpu.trace_start"() <{level = 10 : i32, message = "bmn,bnq->bmq"}> : () -> ()
    %cst_12 = arith.constant dense<0.000000e+00> : vector<2x128x128xf32>
    %6 = tpu.matmul %4, %5, %cst_12 {dimension_numbers = #tpu.dot_dimension_numbers<[2], [1], [1], [2], [0, 0, 0, 1, 1, 2], [0], [0]>} : vector<2x128x128xf32>, vector<2x128x128xf32>, vector<2x128x128xf32> -> vector<2x128x128xf32>
    "tpu.trace_stop"() : () -> ()
    %cst_13 = arith.constant dense<0xFF800000> : vector<128x128xf32>
    %7 = vector.multi_reduction <maximumf>, %6, %cst_13 [0] : vector<2x128x128xf32> to vector<128x128xf32>
    %8 = vector.shape_cast %7 : vector<128x128xf32> to vector<1x128x128xf32>
    %9 = vector.broadcast %8 : vector<1x128x128xf32> to vector<2x128x128xf32>
    %10 = arith.subf %6, %9 : vector<2x128x128xf32>
    %11 = math.exp %10 : vector<2x128x128xf32>
    %cst_14 = arith.constant dense<0.000000e+00> : vector<128x128xf32>
    %12 = vector.multi_reduction <add>, %11, %cst_14 [0] : vector<2x128x128xf32> to vector<128x128xf32>
    %13 = vector.shape_cast %12 : vector<128x128xf32> to vector<1x128x128xf32>
    %14 = tpu.reciprocal %13 {approx = true} : vector<1x128x128xf32> -> vector<1x128x128xf32>
    %15 = vector.broadcast %14 : vector<1x128x128xf32> to vector<2x128x128xf32>
    %16 = arith.mulf %11, %15 : vector<2x128x128xf32>
    %c0_15 = arith.constant 0 : index
    %c0_16 = arith.constant 0 : index
    %c0_17 = arith.constant 0 : index
    %17 = vector.load %arg6[%c0_15, %c0_16, %c0_17] : memref<2x128x128xf32, #tpu.memory_space<vmem>>, vector<2x128x128xf32>
    tpu.vector_store %arg6[%c0_15, %c0_16, %c0_17], %16 {strides = array<i32>} : memref<2x128x128xf32, #tpu.memory_space<vmem>>, vector<2x128x128xf32>,
    return
  }
  func.func @transform_0(%arg0: i32, %arg1: i32) -> (i32, i32, i32) {
    %c0_i32 = arith.constant 0 : i32
    %c0_i32_0 = arith.constant 0 : i32
    %c0_i32_1 = arith.constant 0 : i32
    return %c0_i32, %arg0, %c0_i32_0 : i32, i32, i32
  }
  func.func @transform_1(%arg0: i32, %arg1: i32) -> (i32, i32, i32) {
    %c0_i32 = arith.constant 0 : i32
    %c0_i32_0 = arith.constant 0 : i32
    %c0_i32_1 = arith.constant 0 : i32
    %c0_i32_2 = arith.constant 0 : i32
    return %c0_i32, %c0_i32_0, %c0_i32_1 : i32, i32, i32
  }
  func.func @transform_2(%arg0: i32, %arg1: i32) -> (i32, i32, i32) {
    %c0_i32 = arith.constant 0 : i32
    %c0_i32_0 = arith.constant 0 : i32
    %c0_i32_1 = arith.constant 0 : i32
    %c0_i32_2 = arith.constant 0 : i32
    return %c0_i32, %c0_i32_0, %c0_i32_1 : i32, i32, i32
  }
  func.func @transform_3(%arg0: i32, %arg1: i32) -> (i32, i32, i32) {
    %c0_i32 = arith.constant 0 : i32
    %c0_i32_0 = arith.constant 0 : i32
    %c0_i32_1 = arith.constant 0 : i32
    return %c0_i32, %c0_i32_0, %arg1 : i32, i32, i32
  }
  func.func @transform_4(%arg0: i32, %arg1: i32) -> (i32, i32, i32) {
    %c0_i32 = arith.constant 0 : i32
    %c0_i32_0 = arith.constant 0 : i32
    return %c0_i32, %arg0, %arg1 : i32, i32, i32
  }
}

</mosaic_0001>

<llo_original>
// kernel: model_forward.1
$region0: #{model_forward.1}
  #allocation0 [shape = 'u32[]', space=smem, size = 0x4, offset = 0x4, fixed_abs, tag = 'smem constant byte address 0x4 - core index']
  #allocation1 [shape = 'u32[144,128]{1,0:T(1,128)}', space=vmem, size = 0x12000, scoped, tag = 'internal scratch']
  #allocation6 [shape = 's32[]', space=sflag, size = 0x4, offset = 0, fixed_abs, tag = 'sflag constant byte address 0x0 - dummy sync flag']
  %s0 = inlined_call_operand.vmem [shape: f32[2,256,128], index: 0, kind: input, shape index: {}]
  %s1 = inlined_call_operand.vmem [shape: f32[2,128,128], index: 1, kind: input, shape index: {}]
  %s2 = inlined_call_operand.vmem [shape: f32[2,128,128], index: 2, kind: input, shape index: {}]
  %s3 = inlined_call_operand.vmem [shape: f32[2,128,256], index: 3, kind: input, shape index: {}]
  %s4 = inlined_call_operand.hbm [shape: f32[2,256,256], index: 4, kind: output, shape index: {}]
  %s5 = sld [smem:[#allocation0]]
  $region125: #{model_forward.1} parent=0
    _
  %s7 = ssub.s32 1, %s5
  %s8 = scalar_select 0, %s7, %s5
  $region1: #{model_forward.1} parent=0
    #allocation2 [shape = 'u8[262144]{0}', space=vmem, size = 0x40000, scoped, tag = 'input window, operand 0']
    #allocation3 [shape = 'u8[262144]{0}', space=vmem, size = 0x40000, scoped, tag = 'input window, operand 3']
    #allocation4 [shape = 'u8[262144]{0}', space=vmem, size = 0x40000, scoped, tag = 'output window, operand 0']
    #allocation5 [shape = 's32[2]{0}', space=sflag, size = 0x8, scoped, tag = 'scoped memory for model_forward.1']
    %9 = vsyncpa [#allocation5], 0
    %s10 = scalar_lea.sflag [#allocation5], 1
    %11 = vsyncpa %s10, 0
    loop: start=0, step=1, limit=6
    $region2: #{model_forward.1} parent=1 // loop_pre_header
      _
    $region3: #{model_forward.1} parent=1 // loop_header
      %s13 = sphi 0, %s17
      %p14 = scmp.ge.s32.totalorder %s13, 6
      %s20 = sphi 0, %s32
      %s21 = sphi 0, %s28
      %s22 = sphi 0, %s20
      %s23 = sphi 0, %s21
      %s24 = sphi 0, %s22
      %s25 = sphi 0, %s23
      %s35 = sphi 0, %s37
      %s38 = sphi 0, %s35
      %s39 = sphi 0, %s38
      %s55 = sphi 0, %s39
      %s59 = sphi 0, %s59
      %s61 = sphi 0, %s59
      %s62 = sphi 0, %s61
      %s76 = sphi 0, %s62
      %s80 = sphi 0, %s80
      %s82 = sphi 0, %s80
      %s83 = sphi 0, %s82
      %s97 = sphi 0, %s83
      %s103 = sphi 0, %s105
      %s106 = sphi 0, %s103
      %s107 = sphi 0, %s106
      %s123 = sphi 0, %s107
      %s131 = sphi 0, %s133
      %s134 = sphi 0, %s131
      %s135 = sphi 0, %s134
      %s151 = sphi 0, %s135
    $region4: #{model_forward.1} parent=1 // loop_header_branch
      %16 = sbr.rel (%p14) target = $region8
    $region5: #{model_forward.1} parent=1 // loop_body
      %s18 = ssub.s32 %s13, 1
      %s19 = ssub.s32 %s13, 2
      %s26 = sadd.s32 1, %s21
      %p27 = scmp.ge.s32.totalorder %s26, 2
      %s28 = scalar_select %p27, 0, %s26
      %s29 = sadd.s32 1, %s20
      %s30 = scalar_select %p27, %s29, %s20
      %p31 = scmp.ge.s32.totalorder %s30, 2
      %s32 = scalar_select %p31, 0, %s30
      %s33 = ssub.s32 %s20, %s32
      %p34 = scmp.eq.s32.totalorder %s33, 0
      %s36 = sadd.s32 %s35, 1
      %s37 = scalar_select %p34, %s35, %s36
      %p40 = pneg %p34
      %p41 = scmp.eq.s32.totalorder %s13, 3
      %p42 = por %p40, %p41
      %p43 = scmp.ne.s32.totalorder %s35, %s38
      %p44 = scmp.eq.s32.totalorder %s13, 0
      %p45 = por %p43, %p44
      %p46 = scmp.ne.s32.totalorder %s35, %s38
      %p47 = scmp.eq.s32.totalorder %s18, 3
      %p48 = por %p46, %p47
      %p49 = scmp.ne.s32.totalorder %s38, %s39
      %p50 = scmp.eq.s32.totalorder %s18, 0
      %p51 = por %p49, %p50
      %p52 = scmp.ne.s32.totalorder %s38, %s39
      %p53 = scmp.eq.s32.totalorder %s19, 3
      %p54 = por %p52, %p53
      %p56 = scmp.ne.s32.totalorder %s39, %s55
      %p57 = scmp.eq.s32.totalorder %s19, 0
      %p58 = por %p56, %p57
      %s60 = sadd.s32 %s59, 1
      %p63 = scmp.eq.s32.totalorder %s13, 3
      %p64 = scmp.ne.s32.totalorder %s59, %s61
      %p65 = scmp.eq.s32.totalorder %s13, 0
      %p66 = por %p64, %p65
      %p67 = scmp.ne.s32.totalorder %s59, %s61
      %p68 = scmp.eq.s32.totalorder %s18, 3
      %p69 = por %p67, %p68
      %p70 = scmp.ne.s32.totalorder %s61, %s62
      %p71 = scmp.eq.s32.totalorder %s18, 0
      %p72 = por %p70, %p71
      %p73 = scmp.ne.s32.totalorder %s61, %s62
      %p74 = scmp.eq.s32.totalorder %s19, 3
      %p75 = por %p73, %p74
      %p77 = scmp.ne.s32.totalorder %s62, %s76
      %p78 = scmp.eq.s32.totalorder %s19, 0
      %p79 = por %p77, %p78
      %s81 = sadd.s32 %s80, 1
      %p84 = scmp.eq.s32.totalorder %s13, 3
      %p85 = scmp.ne.s32.totalorder %s80, %s82
      %p86 = scmp.eq.s32.totalorder %s13, 0
      %p87 = por %p85, %p86
      %p88 = scmp.ne.s32.totalorder %s80, %s82
      %p89 = scmp.eq.s32.totalorder %s18, 3
      %p90 = por %p88, %p89
      %p91 = scmp.ne.s32.totalorder %s82, %s83
      %p92 = scmp.eq.s32.totalorder %s18, 0
      %p93 = por %p91, %p92
      %p94 = scmp.ne.s32.totalorder %s82, %s83
      %p95 = scmp.eq.s32.totalorder %s19, 3
      %p96 = por %p94, %p95
      %p98 = scmp.ne.s32.totalorder %s83, %s97
      %p99 = scmp.eq.s32.totalorder %s19, 0
      %p100 = por %p98, %p99
      %s101 = ssub.s32 %s21, %s28
      %p102 = scmp.eq.s32.totalorder %s101, 0
      %s104 = sadd.s32 %s103, 1
      %s105 = scalar_select %p102, %s103, %s104
      %p108 = pneg %p102
      %p109 = scmp.eq.s32.totalorder %s13, 3
      %p110 = por %p108, %p109
      %p111 = scmp.ne.s32.totalorder %s103, %s106
      %p112 = scmp.eq.s32.totalorder %s13, 0
      %p113 = por %p111, %p112
      %p114 = scmp.ne.s32.totalorder %s103, %s106
      %p115 = scmp.eq.s32.totalorder %s18, 3
      %p116 = por %p114, %p115
      %p117 = scmp.ne.s32.totalorder %s106, %s107
      %p118 = scmp.eq.s32.totalorder %s18, 0
      %p119 = por %p117, %p118
      %p120 = scmp.ne.s32.totalorder %s106, %s107
      %p121 = scmp.eq.s32.totalorder %s19, 3
      %p122 = por %p120, %p121
      %p124 = scmp.ne.s32.totalorder %s107, %s123
      %p125 = scmp.eq.s32.totalorder %s19, 0
      %p126 = por %p124, %p125
      %s127 = ssub.s32 %s20, %s32
      %s128 = ssub.s32 %s21, %s28
      %s129 = sor.u32 %s127, %s128
      %p130 = scmp.eq.s32.totalorder %s129, 0
      %s132 = sadd.s32 %s131, 1
      %s133 = scalar_select %p130, %s131, %s132
      %p136 = pneg %p130
      %p137 = scmp.eq.s32.totalorder %s13, 3
      %p138 = por %p136, %p137
      %p139 = scmp.ne.s32.totalorder %s131, %s134
      %p140 = scmp.eq.s32.totalorder %s13, 0
      %p141 = por %p139, %p140
      %p142 = scmp.ne.s32.totalorder %s131, %s134
      %p143 = scmp.eq.s32.totalorder %s18, 3
      %p144 = por %p142, %p143
      %p145 = scmp.ne.s32.totalorder %s134, %s135
      %p146 = scmp.eq.s32.totalorder %s18, 0
      %p147 = por %p145, %p146
      %p148 = scmp.ne.s32.totalorder %s134, %s135
      %p149 = scmp.eq.s32.totalorder %s19, 3
      %p150 = por %p148, %p149
      %p152 = scmp.ne.s32.totalorder %s135, %s151
      %p153 = scmp.eq.s32.totalorder %s19, 0
      %p154 = por %p152, %p153
      %p155 = scmp.le.s32.totalorder 1, %s13
      %p156 = scmp.lt.s32.totalorder %s13, 5
      %p157 = pnand %p155, %p156
      %p158 = pneg %p157
      // Predicated region
      $region9: #{model_forward.1} parent=5 // pred_check
        _
      $region10: #{model_forward.1} parent=5 // pred_check_branch
        %160 = sbr.rel (%p157) target = $region12
      $region11: #{model_forward.1} parent=5 // pred_region
        %s161 = ssub.s32 %s13, 1
        // Predicated region
        $region13: #{model_forward.1} parent=11 // pred_check
          %p162 = pneg %p72
        $region14: #{model_forward.1} parent=11 // pred_check_branch
          %164 = sbr.rel (%p162) target = $region16
        $region15: #{model_forward.1} parent=11 // pred_region
          _
        $region16: #{model_forward.1} parent=11 // pred_fallthru
          _
        // Predicated region
        $region17: #{model_forward.1} parent=11 // pred_check
          %p165 = pneg %p93
        $region18: #{model_forward.1} parent=11 // pred_check_branch
          %167 = sbr.rel (%p165) target = $region20
        $region19: #{model_forward.1} parent=11 // pred_region
          _
        $region20: #{model_forward.1} parent=11 // pred_fallthru
          _
      $region12: #{model_forward.1} parent=5 // pred_fallthru
        _
      %p168 = scmp.lt.s32.totalorder %s13, 4
      // Predicated region
      $region21: #{model_forward.1} parent=5 // pred_check
        %p169 = pneg %p168
      $region22: #{model_forward.1} parent=5 // pred_check_branch
        %171 = sbr.rel (%p169) target = $region24
      $region23: #{model_forward.1} parent=5 // pred_region
        // Predicated region
        $region25: #{model_forward.1} parent=23 // pred_check
          %p172 = pneg %p45
        $region26: #{model_forward.1} parent=23 // pred_check_branch
          %174 = sbr.rel (%p172) target = $region28
        $region27: #{model_forward.1} parent=23 // pred_region
          %s175 = sand.u32 %s35, 1
          %s176 = sand.u32 %s35, 1
          %s177 = smul.addr %s176, 256
          %s178 = scalar_lea.vmem [#allocation2], %s177
          %s179 = smul.u32 16, %s20
          %s180 = smul.addr %s179, 8
          %s181 = scalar_lea.vmem %s0, %s180
          // Predicated region
          $region29: #{model_forward.1} parent=27 // pred_check
            _
          $region30: #{model_forward.1} parent=27 // pred_check_branch
            %183 = sbr.rel (0) target = $region32
          $region31: #{model_forward.1} parent=27 // pred_region
            // Predicated region
            $region33: #{model_forward.1} parent=31 // pred_check
              _
            $region34: #{model_forward.1} parent=31 // pred_check_branch
              %185 = sbr.rel (0) target = $region36
            $region35: #{model_forward.1} parent=31 // pred_region
              // Predicated region
              $region48: #{model_forward.1} parent=35 // pred_check
                _
              $region49: #{model_forward.1} parent=35 // pred_check_branch
                %263 = sbr.rel (0) target = $region51
              $region50: #{model_forward.1} parent=35 // pred_region
                loop: start=0, step=1, limit=1
                $region52: #{model_forward.1} parent=50 // loop_pre_header
                  _
                $region53: #{model_forward.1} parent=50 // loop_header
                  %s265 = sphi 0, %s269
                  %p266 = scmp.ge.s32.totalorder %s265, 1
                  %s270 = sphi %s181, %s181
                  %s271 = sphi %s178, %s178
                $region54: #{model_forward.1} parent=50 // loop_header_branch
                  %268 = sbr.rel (%p266) target = $region58
                $region55: #{model_forward.1} parent=50 // loop_body
                  %v272 = vld [vmem:[%s270] sm:$0xff]
                  %273 = vst [vmem:[%s271] sm:$0xff] %v272
                  %v274 = vld [vmem:[%s270 + $0x8] sm:$0xff]
                  %275 = vst [vmem:[%s271 + $0x8] sm:$0xff] %v274
                  %v276 = vld [vmem:[%s270 + $0x10] sm:$0xff]
                  %277 = vst [vmem:[%s271 + $0x10] sm:$0xff] %v276
                  %v278 = vld [vmem:[%s270 + $0x18] sm:$0xff]
                  %279 = vst [vmem:[%s271 + $0x18] sm:$0xff] %v278
                  %v280 = vld [vmem:[%s270 + $0x20] sm:$0xff]
                  %281 = vst [vmem:[%s271 + $0x20] sm:$0xff] %v280
                  %v282 = vld [vmem:[%s270 + $0x28] sm:$0xff]
                  %283 = vst [vmem:[%s271 + $0x28] sm:$0xff] %v282
                  %v284 = vld [vmem:[%s270 + $0x30] sm:$0xff]
                  %285 = vst [vmem:[%s271 + $0x30] sm:$0xff] %v284
                  %v286 = vld [vmem:[%s270 + $0x38] sm:$0xff]
                  %287 = vst [vmem:[%s271 + $0x38] sm:$0xff] %v286
                  %v288 = vld [vmem:[%s270 + $0x40] sm:$0xff]
                  %289 = vst [vmem:[%s271 + $0x40] sm:$0xff] %v288
                  %v290 = vld [vmem:[%s270 + $0x48] sm:$0xff]
                  %291 = vst [vmem:[%s271 + $0x48] sm:$0xff] %v290
                  %v292 = vld [vmem:[%s270 + $0x50] sm:$0xff]
                  %293 = vst [vmem:[%s271 + $0x50] sm:$0xff] %v292
                  %v294 = vld [vmem:[%s270 + $0x58] sm:$0xff]
                  %295 = vst [vmem:[%s271 + $0x58] sm:$0xff] %v294
                  %v296 = vld [vmem:[%s270 + $0x60] sm:$0xff]
                  %297 = vst [vmem:[%s271 + $0x60] sm:$0xff] %v296
                  %v298 = vld [vmem:[%s270 + $0x68] sm:$0xff]
                  %299 = vst [vmem:[%s271 + $0x68] sm:$0xff] %v298
                  %v300 = vld [vmem:[%s270 + $0x70] sm:$0xff]
                  %301 = vst [vmem:[%s271 + $0x70] sm:$0xff] %v300
                  %v302 = vld [vmem:[%s270 + $0x78] sm:$0xff]
                  %303 = vst [vmem:[%s271 + $0x78] sm:$0xff] %v302
                  %v304 = vld [vmem:[%s270 + $0x100] sm:$0xff]
                  %305 = vst [vmem:[%s271 + $0x80] sm:$0xff] %v304
                  %v306 = vld [vmem:[%s270 + $0x108] sm:$0xff]
                  %307 = vst [vmem:[%s271 + $0x88] sm:$0xff] %v306
                  %v308 = vld [vmem:[%s270 + $0x110] sm:$0xff]
                  %309 = vst [vmem:[%s271 + $0x90] sm:$0xff] %v308
                  %v310 = vld [vmem:[%s270 + $0x118] sm:$0xff]
                  %311 = vst [vmem:[%s271 + $0x98] sm:$0xff] %v310
                  %v312 = vld [vmem:[%s270 + $0x120] sm:$0xff]
                  %313 = vst [vmem:[%s271 + $0xa0] sm:$0xff] %v312
                  %v314 = vld [vmem:[%s270 + $0x128] sm:$0xff]
                  %315 = vst [vmem:[%s271 + $0xa8] sm:$0xff] %v314
                  %v316 = vld [vmem:[%s270 + $0x130] sm:$0xff]
                  %317 = vst [vmem:[%s271 + $0xb0] sm:$0xff] %v316
                  %v318 = vld [vmem:[%s270 + $0x138] sm:$0xff]
                  %319 = vst [vmem:[%s271 + $0xb8] sm:$0xff] %v318
                  %v320 = vld [vmem:[%s270 + $0x140] sm:$0xff]
                  %321 = vst [vmem:[%s271 + $0xc0] sm:$0xff] %v320
                  %v322 = vld [vmem:[%s270 + $0x148] sm:$0xff]
                  %323 = vst [vmem:[%s271 + $0xc8] sm:$0xff] %v322
                  %v324 = vld [vmem:[%s270 + $0x150] sm:$0xff]
                  %325 = vst [vmem:[%s271 + $0xd0] sm:$0xff] %v324
                  %v326 = vld [vmem:[%s270 + $0x158] sm:$0xff]
                  %327 = vst [vmem:[%s271 + $0xd8] sm:$0xff] %v326
                  %v328 = vld [vmem:[%s270 + $0x160] sm:$0xff]
                  %329 = vst [vmem:[%s271 + $0xe0] sm:$0xff] %v328
                  %v330 = vld [vmem:[%s270 + $0x168] sm:$0xff]
                  %331 = vst [vmem:[%s271 + $0xe8] sm:$0xff] %v330
                  %v332 = vld [vmem:[%s270 + $0x170] sm:$0xff]
                  %333 = vst [vmem:[%s271 + $0xf0] sm:$0xff] %v332
                  %v334 = vld [vmem:[%s270 + $0x178] sm:$0xff]
                  %335 = vst [vmem:[%s271 + $0xf8] sm:$0xff] %v334
                $region56: #{model_forward.1} parent=50 // loop_footer
                  %s269 = sadd.s32 1, %s265
                $region57: #{model_forward.1} parent=50 // loop_footer_branch
                  %264 = sbr.rel target = $region53
                $region58: #{model_forward.1} parent=50 // loop_exit
                  _
              $region51: #{model_forward.1} parent=35 // pred_fallthru
                _
              // Predicated region
              $region59: #{model_forward.1} parent=35 // pred_check
                _
              $region60: #{model_forward.1} parent=35 // pred_check_branch
                %337 = sbr.rel target = $region62
              $region61: #{model_forward.1} parent=35 // pred_region
                _
              $region62: #{model_forward.1} parent=35 // pred_fallthru
                _
            $region36: #{model_forward.1} parent=31 // pred_fallthru
              _
            // Predicated region
            $region37: #{model_forward.1} parent=31 // pred_check
              _
            $region38: #{model_forward.1} parent=31 // pred_check_branch
              %187 = sbr.rel target = $region40
            $region39: #{model_forward.1} parent=31 // pred_region
              %s189 = ssub.s32 256, 1
              loop: start=0, step=1, limit=1
              $region41: #{model_forward.1} parent=39 // loop_pre_header
                _
              $region42: #{model_forward.1} parent=39 // loop_header
                %s191 = sphi 0, %s195
                %p192 = scmp.ge.s32.totalorder %s191, 1
                %s196 = sphi %s181, %s181
                %s197 = sphi %s178, %s178
              $region43: #{model_forward.1} parent=39 // loop_header_branch
                %194 = sbr.rel (%p192) target = $region47
              $region44: #{model_forward.1} parent=39 // loop_body
                %v198 = vld [vmem:[%s196] sm:%s189]
                %199 = vst [vmem:[%s197] sm:%s189] %v198
                %v200 = vld [vmem:[%s196 + $0x8] sm:%s189]
                %201 = vst [vmem:[%s197 + $0x8] sm:%s189] %v200
                %v202 = vld [vmem:[%s196 + $0x10] sm:%s189]
                %203 = vst [vmem:[%s197 + $0x10] sm:%s189] %v202
                %v204 = vld [vmem:[%s196 + $0x18] sm:%s189]
                %205 = vst [vmem:[%s197 + $0x18] sm:%s189] %v204
                %v206 = vld [vmem:[%s196 + $0x20] sm:%s189]
                %207 = vst [vmem:[%s197 + $0x20] sm:%s189] %v206
                %v208 = vld [vmem:[%s196 + $0x28] sm:%s189]
                %209 = vst [vmem:[%s197 + $0x28] sm:%s189] %v208
                %v210 = vld [vmem:[%s196 + $0x30] sm:%s189]
                %211 = vst [vmem:[%s197 + $0x30] sm:%s189] %v210
                %v212 = vld [vmem:[%s196 + $0x38] sm:%s189]
                %213 = vst [vmem:[%s197 + $0x38] sm:%s189] %v212
                %v214 = vld [vmem:[%s196 + $0x40] sm:%s189]
                %215 = vst [vmem:[%s197 + $0x40] sm:%s189] %v214
                %v216 = vld [vmem:[%s196 + $0x48] sm:%s189]
                %217 = vst [vmem:[%s197 + $0x48] sm:%s189] %v216
                %v218 = vld [vmem:[%s196 + $0x50] sm:%s189]
                %219 = vst [vmem:[%s197 + $0x50] sm:%s189] %v218
                %v220 = vld [vmem:[%s196 + $0x58] sm:%s189]
                %221 = vst [vmem:[%s197 + $0x58] sm:%s189] %v220
                %v222 = vld [vmem:[%s196 + $0x60] sm:%s189]
                %223 = vst [vmem:[%s197 + $0x60] sm:%s189] %v222
                %v224 = vld [vmem:[%s196 + $0x68] sm:%s189]
                %225 = vst [vmem:[%s197 + $0x68] sm:%s189] %v224
                %v226 = vld [vmem:[%s196 + $0x70] sm:%s189]
                %227 = vst [vmem:[%s197 + $0x70] sm:%s189] %v226
                %v228 = vld [vmem:[%s196 + $0x78] sm:%s189]
                %229 = vst [vmem:[%s197 + $0x78] sm:%s189] %v228
                %v230 = vld [vmem:[%s196 + $0x100] sm:%s189]
                %231 = vst [vmem:[%s197 + $0x80] sm:%s189] %v230
                %v232 = vld [vmem:[%s196 + $0x108] sm:%s189]
                %233 = vst [vmem:[%s197 + $0x88] sm:%s189] %v232
                %v234 = vld [vmem:[%s196 + $0x110] sm:%s189]
                %235 = vst [vmem:[%s197 + $0x90] sm:%s189] %v234
                %v236 = vld [vmem:[%s196 + $0x118] sm:%s189]
                %237 = vst [vmem:[%s197 + $0x98] sm:%s189] %v236
                %v238 = vld [vmem:[%s196 + $0x120] sm:%s189]
                %239 = vst [vmem:[%s197 + $0xa0] sm:%s189] %v238
                %v240 = vld [vmem:[%s196 + $0x128] sm:%s189]
                %241 = vst [vmem:[%s197 + $0xa8] sm:%s189] %v240
                %v242 = vld [vmem:[%s196 + $0x130] sm:%s189]
                %243 = vst [vmem:[%s197 + $0xb0] sm:%s189] %v242
                %v244 = vld [vmem:[%s196 + $0x138] sm:%s189]
                %245 = vst [vmem:[%s197 + $0xb8] sm:%s189] %v244
                %v246 = vld [vmem:[%s196 + $0x140] sm:%s189]
                %247 = vst [vmem:[%s197 + $0xc0] sm:%s189] %v246
                %v248 = vld [vmem:[%s196 + $0x148] sm:%s189]
                %249 = vst [vmem:[%s197 + $0xc8] sm:%s189] %v248
                %v250 = vld [vmem:[%s196 + $0x150] sm:%s189]
                %251 = vst [vmem:[%s197 + $0xd0] sm:%s189] %v250
                %v252 = vld [vmem:[%s196 + $0x158] sm:%s189]
                %253 = vst [vmem:[%s197 + $0xd8] sm:%s189] %v252
                %v254 = vld [vmem:[%s196 + $0x160] sm:%s189]
                %255 = vst [vmem:[%s197 + $0xe0] sm:%s189] %v254
                %v256 = vld [vmem:[%s196 + $0x168] sm:%s189]
                %257 = vst [vmem:[%s197 + $0xe8] sm:%s189] %v256
                %v258 = vld [vmem:[%s196 + $0x170] sm:%s189]
                %259 = vst [vmem:[%s197 + $0xf0] sm:%s189] %v258
                %v260 = vld [vmem:[%s196 + $0x178] sm:%s189]
                %261 = vst [vmem:[%s197 + $0xf8] sm:%s189] %v260
              $region45: #{model_forward.1} parent=39 // loop_footer
                %s195 = sadd.s32 1, %s191
              $region46: #{model_forward.1} parent=39 // loop_footer_branch
                %190 = sbr.rel target = $region42
              $region47: #{model_forward.1} parent=39 // loop_exit
                _
            $region40: #{model_forward.1} parent=31 // pred_fallthru
              _
          $region32: #{model_forward.1} parent=27 // pred_fallthru
            _
          %338 = vnop
        $region28: #{model_forward.1} parent=23 // pred_fallthru
          _
        // Predicated region
        $region63: #{model_forward.1} parent=23 // pred_check
          %p339 = pneg %p113
        $region64: #{model_forward.1} parent=23 // pred_check_branch
          %341 = sbr.rel (%p339) target = $region66
        $region65: #{model_forward.1} parent=23 // pred_region
          %s342 = sand.u32 %s103, 1
          %s343 = sand.u32 %s103, 1
          %s344 = smul.addr %s343, 256
          %s345 = scalar_lea.vmem [#allocation3], %s344
          %s346 = smul.addr %s21, 8
          %s347 = scalar_lea.vmem %s3, %s346
          // Predicated region
          $region67: #{model_forward.1} parent=65 // pred_check
            _
          $region68: #{model_forward.1} parent=65 // pred_check_branch
            %349 = sbr.rel (0) target = $region70
          $region69: #{model_forward.1} parent=65 // pred_region
            // Predicated region
            $region71: #{model_forward.1} parent=69 // pred_check
              _
            $region72: #{model_forward.1} parent=69 // pred_check_branch
              %351 = sbr.rel (0) target = $region74
            $region73: #{model_forward.1} parent=69 // pred_region
              // Predicated region
              $region86: #{model_forward.1} parent=73 // pred_check
                _
              $region87: #{model_forward.1} parent=73 // pred_check_branch
                %429 = sbr.rel (0) target = $region89
              $region88: #{model_forward.1} parent=73 // pred_region
                loop: start=0, step=1, limit=1
                $region90: #{model_forward.1} parent=88 // loop_pre_header
                  _
                $region91: #{model_forward.1} parent=88 // loop_header
                  %s431 = sphi 0, %s435
                  %p432 = scmp.ge.s32.totalorder %s431, 1
                  %s436 = sphi %s347, %s347
                  %s437 = sphi %s345, %s345
                $region92: #{model_forward.1} parent=88 // loop_header_branch
                  %434 = sbr.rel (%p432) target = $region96
                $region93: #{model_forward.1} parent=88 // loop_body
                  %v438 = vld [vmem:[%s436] sm:$0xff]
                  %439 = vst [vmem:[%s437] sm:$0xff] %v438
                  %v440 = vld [vmem:[%s436 + $0x10] sm:$0xff]
                  %441 = vst [vmem:[%s437 + $0x8] sm:$0xff] %v440
                  %v442 = vld [vmem:[%s436 + $0x20] sm:$0xff]
                  %443 = vst [vmem:[%s437 + $0x10] sm:$0xff] %v442
                  %v444 = vld [vmem:[%s436 + $0x30] sm:$0xff]
                  %445 = vst [vmem:[%s437 + $0x18] sm:$0xff] %v444
                  %v446 = vld [vmem:[%s436 + $0x40] sm:$0xff]
                  %447 = vst [vmem:[%s437 + $0x20] sm:$0xff] %v446
                  %v448 = vld [vmem:[%s436 + $0x50] sm:$0xff]
                  %449 = vst [vmem:[%s437 + $0x28] sm:$0xff] %v448
                  %v450 = vld [vmem:[%s436 + $0x60] sm:$0xff]
                  %451 = vst [vmem:[%s437 + $0x30] sm:$0xff] %v450
                  %v452 = vld [vmem:[%s436 + $0x70] sm:$0xff]
                  %453 = vst [vmem:[%s437 + $0x38] sm:$0xff] %v452
                  %v454 = vld [vmem:[%s436 + $0x80] sm:$0xff]
                  %455 = vst [vmem:[%s437 + $0x40] sm:$0xff] %v454
                  %v456 = vld [vmem:[%s436 + $0x90] sm:$0xff]
                  %457 = vst [vmem:[%s437 + $0x48] sm:$0xff] %v456
                  %v458 = vld [vmem:[%s436 + $0xa0] sm:$0xff]
                  %459 = vst [vmem:[%s437 + $0x50] sm:$0xff] %v458
                  %v460 = vld [vmem:[%s436 + $0xb0] sm:$0xff]
                  %461 = vst [vmem:[%s437 + $0x58] sm:$0xff] %v460
                  %v462 = vld [vmem:[%s436 + $0xc0] sm:$0xff]
                  %463 = vst [vmem:[%s437 + $0x60] sm:$0xff] %v462
                  %v464 = vld [vmem:[%s436 + $0xd0] sm:$0xff]
                  %465 = vst [vmem:[%s437 + $0x68] sm:$0xff] %v464
                  %v466 = vld [vmem:[%s436 + $0xe0] sm:$0xff]
                  %467 = vst [vmem:[%s437 + $0x70] sm:$0xff] %v466
                  %v468 = vld [vmem:[%s436 + $0xf0] sm:$0xff]
                  %469 = vst [vmem:[%s437 + $0x78] sm:$0xff] %v468
                  %v470 = vld [vmem:[%s436 + $0x100] sm:$0xff]
                  %471 = vst [vmem:[%s437 + $0x80] sm:$0xff] %v470
                  %v472 = vld [vmem:[%s436 + $0x110] sm:$0xff]
                  %473 = vst [vmem:[%s437 + $0x88] sm:$0xff] %v472
                  %v474 = vld [vmem:[%s436 + $0x120] sm:$0xff]
                  %475 = vst [vmem:[%s437 + $0x90] sm:$0xff] %v474
                  %v476 = vld [vmem:[%s436 + $0x130] sm:$0xff]
                  %477 = vst [vmem:[%s437 + $0x98] sm:$0xff] %v476
                  %v478 = vld [vmem:[%s436 + $0x140] sm:$0xff]
                  %479 = vst [vmem:[%s437 + $0xa0] sm:$0xff] %v478
                  %v480 = vld [vmem:[%s436 + $0x150] sm:$0xff]
                  %481 = vst [vmem:[%s437 + $0xa8] sm:$0xff] %v480
                  %v482 = vld [vmem:[%s436 + $0x160] sm:$0xff]
                  %483 = vst [vmem:[%s437 + $0xb0] sm:$0xff] %v482
                  %v484 = vld [vmem:[%s436 + $0x170] sm:$0xff]
                  %485 = vst [vmem:[%s437 + $0xb8] sm:$0xff] %v484
                  %v486 = vld [vmem:[%s436 + $0x180] sm:$0xff]
                  %487 = vst [vmem:[%s437 + $0xc0] sm:$0xff] %v486
                  %v488 = vld [vmem:[%s436 + $0x190] sm:$0xff]
                  %489 = vst [vmem:[%s437 + $0xc8] sm:$0xff] %v488
                  %v490 = vld [vmem:[%s436 + $0x1a0] sm:$0xff]
                  %491 = vst [vmem:[%s437 + $0xd0] sm:$0xff] %v490
                  %v492 = vld [vmem:[%s436 + $0x1b0] sm:$0xff]
                  %493 = vst [vmem:[%s437 + $0xd8] sm:$0xff] %v492
                  %v494 = vld [vmem:[%s436 + $0x1c0] sm:$0xff]
                  %495 = vst [vmem:[%s437 + $0xe0] sm:$0xff] %v494
                  %v496 = vld [vmem:[%s436 + $0x1d0] sm:$0xff]
                  %497 = vst [vmem:[%s437 + $0xe8] sm:$0xff] %v496
                  %v498 = vld [vmem:[%s436 + $0x1e0] sm:$0xff]
                  %499 = vst [vmem:[%s437 + $0xf0] sm:$0xff] %v498
                  %v500 = vld [vmem:[%s436 + $0x1f0] sm:$0xff]
                  %501 = vst [vmem:[%s437 + $0xf8] sm:$0xff] %v500
                $region94: #{model_forward.1} parent=88 // loop_footer
                  %s435 = sadd.s32 1, %s431
                $region95: #{model_forward.1} parent=88 // loop_footer_branch
                  %430 = sbr.rel target = $region91
                $region96: #{model_forward.1} parent=88 // loop_exit
                  _
              $region89: #{model_forward.1} parent=73 // pred_fallthru
                _
              // Predicated region
              $region97: #{model_forward.1} parent=73 // pred_check
                _
              $region98: #{model_forward.1} parent=73 // pred_check_branch
                %503 = sbr.rel target = $region100
              $region99: #{model_forward.1} parent=73 // pred_region
                _
              $region100: #{model_forward.1} parent=73 // pred_fallthru
                _
            $region74: #{model_forward.1} parent=69 // pred_fallthru
              _
            // Predicated region
            $region75: #{model_forward.1} parent=69 // pred_check
              _
            $region76: #{model_forward.1} parent=69 // pred_check_branch
              %353 = sbr.rel target = $region78
            $region77: #{model_forward.1} parent=69 // pred_region
              %s355 = ssub.s32 256, 1
              loop: start=0, step=1, limit=1
              $region79: #{model_forward.1} parent=77 // loop_pre_header
                _
              $region80: #{model_forward.1} parent=77 // loop_header
                %s357 = sphi 0, %s361
                %p358 = scmp.ge.s32.totalorder %s357, 1
                %s362 = sphi %s347, %s347
                %s363 = sphi %s345, %s345
              $region81: #{model_forward.1} parent=77 // loop_header_branch
                %360 = sbr.rel (%p358) target = $region85
              $region82: #{model_forward.1} parent=77 // loop_body
                %v364 = vld [vmem:[%s362] sm:%s355]
                %365 = vst [vmem:[%s363] sm:%s355] %v364
                %v366 = vld [vmem:[%s362 + $0x10] sm:%s355]
                %367 = vst [vmem:[%s363 + $0x8] sm:%s355] %v366
                %v368 = vld [vmem:[%s362 + $0x20] sm:%s355]
                %369 = vst [vmem:[%s363 + $0x10] sm:%s355] %v368
                %v370 = vld [vmem:[%s362 + $0x30] sm:%s355]
                %371 = vst [vmem:[%s363 + $0x18] sm:%s355] %v370
                %v372 = vld [vmem:[%s362 + $0x40] sm:%s355]
                %373 = vst [vmem:[%s363 + $0x20] sm:%s355] %v372
                %v374 = vld [vmem:[%s362 + $0x50] sm:%s355]
                %375 = vst [vmem:[%s363 + $0x28] sm:%s355] %v374
                %v376 = vld [vmem:[%s362 + $0x60] sm:%s355]
                %377 = vst [vmem:[%s363 + $0x30] sm:%s355] %v376
                %v378 = vld [vmem:[%s362 + $0x70] sm:%s355]
                %379 = vst [vmem:[%s363 + $0x38] sm:%s355] %v378
                %v380 = vld [vmem:[%s362 + $0x80] sm:%s355]
                %381 = vst [vmem:[%s363 + $0x40] sm:%s355] %v380
                %v382 = vld [vmem:[%s362 + $0x90] sm:%s355]
                %383 = vst [vmem:[%s363 + $0x48] sm:%s355] %v382
                %v384 = vld [vmem:[%s362 + $0xa0] sm:%s355]
                %385 = vst [vmem:[%s363 + $0x50] sm:%s355] %v384
                %v386 = vld [vmem:[%s362 + $0xb0] sm:%s355]
                %387 = vst [vmem:[%s363 + $0x58] sm:%s355] %v386
                %v388 = vld [vmem:[%s362 + $0xc0] sm:%s355]
                %389 = vst [vmem:[%s363 + $0x60] sm:%s355] %v388
                %v390 = vld [vmem:[%s362 + $0xd0] sm:%s355]
                %391 = vst [vmem:[%s363 + $0x68] sm:%s355] %v390
                %v392 = vld [vmem:[%s362 + $0xe0] sm:%s355]
                %393 = vst [vmem:[%s363 + $0x70] sm:%s355] %v392
                %v394 = vld [vmem:[%s362 + $0xf0] sm:%s355]
                %395 = vst [vmem:[%s363 + $0x78] sm:%s355] %v394
                %v396 = vld [vmem:[%s362 + $0x100] sm:%s355]
                %397 = vst [vmem:[%s363 + $0x80] sm:%s355] %v396
                %v398 = vld [vmem:[%s362 + $0x110] sm:%s355]
                %399 = vst [vmem:[%s363 + $0x88] sm:%s355] %v398
                %v400 = vld [vmem:[%s362 + $0x120] sm:%s355]
                %401 = vst [vmem:[%s363 + $0x90] sm:%s355] %v400
                %v402 = vld [vmem:[%s362 + $0x130] sm:%s355]
                %403 = vst [vmem:[%s363 + $0x98] sm:%s355] %v402
                %v404 = vld [vmem:[%s362 + $0x140] sm:%s355]
                %405 = vst [vmem:[%s363 + $0xa0] sm:%s355] %v404
                %v406 = vld [vmem:[%s362 + $0x150] sm:%s355]
                %407 = vst [vmem:[%s363 + $0xa8] sm:%s355] %v406
                %v408 = vld [vmem:[%s362 + $0x160] sm:%s355]
                %409 = vst [vmem:[%s363 + $0xb0] sm:%s355] %v408
                %v410 = vld [vmem:[%s362 + $0x170] sm:%s355]
                %411 = vst [vmem:[%s363 + $0xb8] sm:%s355] %v410
                %v412 = vld [vmem:[%s362 + $0x180] sm:%s355]
                %413 = vst [vmem:[%s363 + $0xc0] sm:%s355] %v412
                %v414 = vld [vmem:[%s362 + $0x190] sm:%s355]
                %415 = vst [vmem:[%s363 + $0xc8] sm:%s355] %v414
                %v416 = vld [vmem:[%s362 + $0x1a0] sm:%s355]
                %417 = vst [vmem:[%s363 + $0xd0] sm:%s355] %v416
                %v418 = vld [vmem:[%s362 + $0x1b0] sm:%s355]
                %419 = vst [vmem:[%s363 + $0xd8] sm:%s355] %v418
                %v420 = vld [vmem:[%s362 + $0x1c0] sm:%s355]
                %421 = vst [vmem:[%s363 + $0xe0] sm:%s355] %v420
                %v422 = vld [vmem:[%s362 + $0x1d0] sm:%s355]
                %423 = vst [vmem:[%s363 + $0xe8] sm:%s355] %v422
                %v424 = vld [vmem:[%s362 + $0x1e0] sm:%s355]
                %425 = vst [vmem:[%s363 + $0xf0] sm:%s355] %v424
                %v426 = vld [vmem:[%s362 + $0x1f0] sm:%s355]
                %427 = vst [vmem:[%s363 + $0xf8] sm:%s355] %v426
              $region83: #{model_forward.1} parent=77 // loop_footer
                %s361 = sadd.s32 1, %s357
              $region84: #{model_forward.1} parent=77 // loop_footer_branch
                %356 = sbr.rel target = $region80
              $region85: #{model_forward.1} parent=77 // loop_exit
                _
            $region78: #{model_forward.1} parent=69 // pred_fallthru
              _
          $region70: #{model_forward.1} parent=65 // pred_fallthru
            _
          %504 = vnop
        $region66: #{model_forward.1} parent=23 // pred_fallthru
          _
      $region24: #{model_forward.1} parent=5 // pred_fallthru
        _
      %p505 = scmp.le.s32.totalorder 1, %s13
      %p506 = scmp.lt.s32.totalorder %s13, 5
      %p507 = pnand %p505, %p506
      %p508 = pneg %p507
      // Predicated region
      $region101: #{model_forward.1} parent=5 // pred_check
        _
      $region102: #{model_forward.1} parent=5 // pred_check_branch
        %510 = sbr.rel (%p507) target = $region104
      $region103: #{model_forward.1} parent=5 // pred_region
        %s511 = ssub.s32 %s13, 1
        %s512 = sand.u32 %s38, 1
        %s513 = sand.u32 %s38, 1
        %s514 = smul.addr %s513, 256
        %s515 = scalar_lea.vmem [#allocation2], %s514
        // Predicated region
        $region105: #{model_forward.1} parent=103 // pred_check
          %p516 = pneg %p51
        $region106: #{model_forward.1} parent=103 // pred_check_branch
          %518 = sbr.rel (%p516) target = $region108
        $region107: #{model_forward.1} parent=103 // pred_region
          _
        $region108: #{model_forward.1} parent=103 // pred_fallthru
          _
        %s519 = sand.u32 %s106, 1
        %s520 = sand.u32 %s106, 1
        %s521 = smul.addr %s520, 256
        %s522 = scalar_lea.vmem [#allocation3], %s521
        // Predicated region
        $region109: #{model_forward.1} parent=103 // pred_check
          %p523 = pneg %p119
        $region110: #{model_forward.1} parent=103 // pred_check_branch
          %525 = sbr.rel (%p523) target = $region112
        $region111: #{model_forward.1} parent=103 // pred_region
          _
        $region112: #{model_forward.1} parent=103 // pred_fallthru
          _
        %s526 = sand.u32 %s38, 1
        %s527 = sand.u32 %s38, 1
        %s528 = smul.addr %s527, 256
        %s529 = scalar_lea.vmem [#allocation2], %s528
        %p530 = pneg %p51
        %p531 = pneg %p48
        %p532 = pneg %p72
        %p533 = pneg %p69
        %p534 = pneg %p93
        %p535 = pneg %p90
        %s536 = sand.u32 %s106, 1
        %s537 = sand.u32 %s106, 1
        %s538 = smul.addr %s537, 256
        %s539 = scalar_lea.vmem [#allocation3], %s538
        %p540 = pneg %p119
        %p541 = pneg %p116
        %p542 = pneg %p147
        %p543 = pneg %p144
        %s544 = sand.u32 %s134, 1
        %s545 = scalar_lea.sflag [#allocation5], %s544
        %s546 = sand.u32 %s134, 1
        %s547 = smul.addr %s546, 256
        %s548 = scalar_lea.vmem [#allocation4], %s547
        %s549 = smul.u32 16, %s22
        %s550 = smul.u32 16, %s22
        %v551 = vld [vmem:[%s515] sm:$0xff]
        %v552 = vld [vmem:[%s515 + $0x8] sm:$0xff]
        %v553 = vld [vmem:[%s515 + $0x10] sm:$0xff]
        %v554 = vld [vmem:[%s515 + $0x18] sm:$0xff]
        %v555 = vld [vmem:[%s515 + $0x20] sm:$0xff]
        %v556 = vld [vmem:[%s515 + $0x28] sm:$0xff]
        %v557 = vld [vmem:[%s515 + $0x30] sm:$0xff]
        %v558 = vld [vmem:[%s515 + $0x38] sm:$0xff]
        %v559 = vld [vmem:[%s515 + $0x40] sm:$0xff]
        %v560 = vld [vmem:[%s515 + $0x48] sm:$0xff]
        %v561 = vld [vmem:[%s515 + $0x50] sm:$0xff]
        %v562 = vld [vmem:[%s515 + $0x58] sm:$0xff]
        %v563 = vld [vmem:[%s515 + $0x60] sm:$0xff]
        %v564 = vld [vmem:[%s515 + $0x68] sm:$0xff]
        %v565 = vld [vmem:[%s515 + $0x70] sm:$0xff]
        %v566 = vld [vmem:[%s515 + $0x78] sm:$0xff]
        %v567 = vld [vmem:[%s515 + $0x80] sm:$0xff]
        %v568 = vld [vmem:[%s515 + $0x88] sm:$0xff]
        %v569 = vld [vmem:[%s515 + $0x90] sm:$0xff]
        %v570 = vld [vmem:[%s515 + $0x98] sm:$0xff]
        %v571 = vld [vmem:[%s515 + $0xa0] sm:$0xff]
        %v572 = vld [vmem:[%s515 + $0xa8] sm:$0xff]
        %v573 = vld [vmem:[%s515 + $0xb0] sm:$0xff]
        %v574 = vld [vmem:[%s515 + $0xb8] sm:$0xff]
        %v575 = vld [vmem:[%s515 + $0xc0] sm:$0xff]
        %v576 = vld [vmem:[%s515 + $0xc8] sm:$0xff]
        %v577 = vld [vmem:[%s515 + $0xd0] sm:$0xff]
        %v578 = vld [vmem:[%s515 + $0xd8] sm:$0xff]
        %v579 = vld [vmem:[%s515 + $0xe0] sm:$0xff]
        %v580 = vld [vmem:[%s515 + $0xe8] sm:$0xff]
        %v581 = vld [vmem:[%s515 + $0xf0] sm:$0xff]
        %v582 = vld [vmem:[%s515 + $0xf8] sm:$0xff]
        %v583 = vld [vmem:[%s1] sm:$0xff]
        %v584 = vld [vmem:[%s1 + $0x8] sm:$0xff]
        %v585 = vld [vmem:[%s1 + $0x10] sm:$0xff]
        %v586 = vld [vmem:[%s1 + $0x18] sm:$0xff]
        %v587 = vld [vmem:[%s1 + $0x20] sm:$0xff]
        %v588 = vld [vmem:[%s1 + $0x28] sm:$0xff]
        %v589 = vld [vmem:[%s1 + $0x30] sm:$0xff]
        %v590 = vld [vmem:[%s1 + $0x38] sm:$0xff]
        %v591 = vld [vmem:[%s1 + $0x40] sm:$0xff]
        %v592 = vld [vmem:[%s1 + $0x48] sm:$0xff]
        %v593 = vld [vmem:[%s1 + $0x50] sm:$0xff]
        %v594 = vld [vmem:[%s1 + $0x58] sm:$0xff]
        %v595 = vld [vmem:[%s1 + $0x60] sm:$0xff]
        %v596 = vld [vmem:[%s1 + $0x68] sm:$0xff]
        %v597 = vld [vmem:[%s1 + $0x70] sm:$0xff]
        %v598 = vld [vmem:[%s1 + $0x78] sm:$0xff]
        %v599 = vld [vmem:[%s1 + $0x80] sm:$0xff]
        %v600 = vld [vmem:[%s1 + $0x88] sm:$0xff]
        %v601 = vld [vmem:[%s1 + $0x90] sm:$0xff]
        %v602 = vld [vmem:[%s1 + $0x98] sm:$0xff]
        %v603 = vld [vmem:[%s1 + $0xa0] sm:$0xff]
        %v604 = vld [vmem:[%s1 + $0xa8] sm:$0xff]
        %v605 = vld [vmem:[%s1 + $0xb0] sm:$0xff]
        %v606 = vld [vmem:[%s1 + $0xb8] sm:$0xff]
        %v607 = vld [vmem:[%s1 + $0xc0] sm:$0xff]
        %v608 = vld [vmem:[%s1 + $0xc8] sm:$0xff]
        %v609 = vld [vmem:[%s1 + $0xd0] sm:$0xff]
        %v610 = vld [vmem:[%s1 + $0xd8] sm:$0xff]
        %v611 = vld [vmem:[%s1 + $0xe0] sm:$0xff]
        %v612 = vld [vmem:[%s1 + $0xe8] sm:$0xff]
        %v613 = vld [vmem:[%s1 + $0xf0] sm:$0xff]
        %v614 = vld [vmem:[%s1 + $0xf8] sm:$0xff]
        %v615 = vld [vmem:[%s2] sm:$0xff]
        %v616 = vld [vmem:[%s2 + $0x8] sm:$0xff]
        %v617 = vld [vmem:[%s2 + $0x10] sm:$0xff]
        %v618 = vld [vmem:[%s2 + $0x18] sm:$0xff]
        %v619 = vld [vmem:[%s2 + $0x20] sm:$0xff]
        %v620 = vld [vmem:[%s2 + $0x28] sm:$0xff]
        %v621 = vld [vmem:[%s2 + $0x30] sm:$0xff]
        %v622 = vld [vmem:[%s2 + $0x38] sm:$0xff]
        %v623 = vld [vmem:[%s2 + $0x40] sm:$0xff]
        %v624 = vld [vmem:[%s2 + $0x48] sm:$0xff]
        %v625 = vld [vmem:[%s2 + $0x50] sm:$0xff]
        %v626 = vld [vmem:[%s2 + $0x58] sm:$0xff]
        %v627 = vld [vmem:[%s2 + $0x60] sm:$0xff]
        %v628 = vld [vmem:[%s2 + $0x68] sm:$0xff]
        %v629 = vld [vmem:[%s2 + $0x70] sm:$0xff]
        %v630 = vld [vmem:[%s2 + $0x78] sm:$0xff]
        %v631 = vld [vmem:[%s2 + $0x80] sm:$0xff]
        %v632 = vld [vmem:[%s2 + $0x88] sm:$0xff]
        %v633 = vld [vmem:[%s2 + $0x90] sm:$0xff]
        %v634 = vld [vmem:[%s2 + $0x98] sm:$0xff]
        %v635 = vld [vmem:[%s2 + $0xa0] sm:$0xff]
        %v636 = vld [vmem:[%s2 + $0xa8] sm:$0xff]
        %v637 = vld [vmem:[%s2 + $0xb0] sm:$0xff]
        %v638 = vld [vmem:[%s2 + $0xb8] sm:$0xff]
        %v639 = vld [vmem:[%s2 + $0xc0] sm:$0xff]
        %v640 = vld [vmem:[%s2 + $0xc8] sm:$0xff]
        %v641 = vld [vmem:[%s2 + $0xd0] sm:$0xff]
        %v642 = vld [vmem:[%s2 + $0xd8] sm:$0xff]
        %v643 = vld [vmem:[%s2 + $0xe0] sm:$0xff]
        %v644 = vld [vmem:[%s2 + $0xe8] sm:$0xff]
        %v645 = vld [vmem:[%s2 + $0xf0] sm:$0xff]
        %v646 = vld [vmem:[%s2 + $0xf8] sm:$0xff]
        %v647 = vld [vmem:[%s522] sm:$0xff]
        %v648 = vld [vmem:[%s522 + $0x8] sm:$0xff]
        %v649 = vld [vmem:[%s522 + $0x10] sm:$0xff]
        %v650 = vld [vmem:[%s522 + $0x18] sm:$0xff]
        %v651 = vld [vmem:[%s522 + $0x20] sm:$0xff]
        %v652 = vld [vmem:[%s522 + $0x28] sm:$0xff]
        %v653 = vld [vmem:[%s522 + $0x30] sm:$0xff]
        %v654 = vld [vmem:[%s522 + $0x38] sm:$0xff]
        %v655 = vld [vmem:[%s522 + $0x40] sm:$0xff]
        %v656 = vld [vmem:[%s522 + $0x48] sm:$0xff]
        %v657 = vld [vmem:[%s522 + $0x50] sm:$0xff]
        %v658 = vld [vmem:[%s522 + $0x58] sm:$0xff]
        %v659 = vld [vmem:[%s522 + $0x60] sm:$0xff]
        %v660 = vld [vmem:[%s522 + $0x68] sm:$0xff]
        %v661 = vld [vmem:[%s522 + $0x70] sm:$0xff]
        %v662 = vld [vmem:[%s522 + $0x78] sm:$0xff]
        %v663 = vld [vmem:[%s522 + $0x80] sm:$0xff]
        %v664 = vld [vmem:[%s522 + $0x88] sm:$0xff]
        %v665 = vld [vmem:[%s522 + $0x90] sm:$0xff]
        %v666 = vld [vmem:[%s522 + $0x98] sm:$0xff]
        %v667 = vld [vmem:[%s522 + $0xa0] sm:$0xff]
        %v668 = vld [vmem:[%s522 + $0xa8] sm:$0xff]
        %v669 = vld [vmem:[%s522 + $0xb0] sm:$0xff]
        %v670 = vld [vmem:[%s522 + $0xb8] sm:$0xff]
        %v671 = vld [vmem:[%s522 + $0xc0] sm:$0xff]
        %v672 = vld [vmem:[%s522 + $0xc8] sm:$0xff]
        %v673 = vld [vmem:[%s522 + $0xd0] sm:$0xff]
        %v674 = vld [vmem:[%s522 + $0xd8] sm:$0xff]
        %v675 = vld [vmem:[%s522 + $0xe0] sm:$0xff]
        %v676 = vld [vmem:[%s522 + $0xe8] sm:$0xff]
        %v677 = vld [vmem:[%s522 + $0xf0] sm:$0xff]
        %v678 = vld [vmem:[%s522 + $0xf8] sm:$0xff]
        %679 = vmatprep.subr.mxu0 0.0
        %680 = vmatpush1.msra.mxu0 %v598
        %681 = vmatprep.subr.mxu0 0.0
        %682 = vmatpush1.msra.mxu0 %v597
        %683 = vmatprep.subr.mxu0 0.0
        %684 = vmatpush1.msra.mxu0 %v596
        %685 = vmatprep.subr.mxu0 0.0
        %686 = vmatpush1.msra.mxu0 %v595
        %687 = vmatprep.subr.mxu0 0.0
        %688 = vmatpush1.msra.mxu0 %v594
        %689 = vmatprep.subr.mxu0 0.0
        %690 = vmatpush1.msra.mxu0 %v593
        %691 = vmatprep.subr.mxu0 0.0
        %692 = vmatpush1.msra.mxu0 %v592
        %693 = vmatprep.subr.mxu0 0.0
        %694 = vmatpush1.msra.mxu0 %v591
        %695 = vmatprep.subr.mxu0 0.0
        %696 = vmatpush1.msra.mxu0 %v590
        %697 = vmatprep.subr.mxu0 0.0
        %698 = vmatpush1.msra.mxu0 %v589
        %699 = vmatprep.subr.mxu0 0.0
        %700 = vmatpush1.msra.mxu0 %v588
        %701 = vmatprep.subr.mxu0 0.0
        %702 = vmatpush1.msra.mxu0 %v587
        %703 = vmatprep.subr.mxu0 0.0
        %704 = vmatpush1.msra.mxu0 %v586
        %705 = vmatprep.subr.mxu0 0.0
        %706 = vmatpush1.msra.mxu0 %v585
        %707 = vmatprep.subr.mxu0 0.0
        %708 = vmatpush1.msra.mxu0 %v584
        %709 = vmatprep.subr.mxu0 0.0
        %710 = vmatpush1.msra.mxu0 %v583
        %711 = vmatprep.subr.mxu0 0.0
        %712 = vmatpush2.msra.mxu0 0.0
        %713 = vmatprep.subr.mxu0 0.0
        %714 = vmatpush2.msra.mxu0 0.0
        %715 = vmatprep.subr.mxu0 0.0
        %716 = vmatpush2.msra.mxu0 0.0
        %717 = vmatprep.subr.mxu0 0.0
        %718 = vmatpush2.msra.mxu0 0.0
        %719 = vmatprep.subr.mxu0 0.0
        %720 = vmatpush2.msra.mxu0 0.0
        %721 = vmatprep.subr.mxu0 0.0
        %722 = vmatpush2.msra.mxu0 0.0
        %723 = vmatprep.subr.mxu0 0.0
        %724 = vmatpush2.msra.mxu0 0.0
        %725 = vmatprep.subr.mxu0 0.0
        %726 = vmatpush2.msra.mxu0 0.0
        %727 = vmatprep.subr.mxu0 0.0
        %728 = vmatpush2.msra.mxu0 0.0
        %729 = vmatprep.subr.mxu0 0.0
        %730 = vmatpush2.msra.mxu0 0.0
        %731 = vmatprep.subr.mxu0 0.0
        %732 = vmatpush2.msra.mxu0 0.0
        %733 = vmatprep.subr.mxu0 0.0
        %734 = vmatpush2.msra.mxu0 0.0
        %735 = vmatprep.subr.mxu0 0.0
        %736 = vmatpush2.msra.mxu0 0.0
        %737 = vmatprep.subr.mxu0 0.0
        %738 = vmatpush2.msra.mxu0 0.0
        %739 = vmatprep.subr.mxu0 0.0
        %740 = vmatpush2.msra.mxu0 0.0
        %741 = vmatprep.subr.mxu0 0.0
        %742 = vmatpush2.msra.mxu0 0.0
        %743 = vmatprep.mubr.f32.mxu0 0.0
        %744 = vmatmul.mubr.f32.gmra.mxu0 %v551
        %v745 = vpop.f32.mrf.mxu0
        %v746 = vadd.f32 0.0, %v745
        %v747 = vpop.f32.mrf.mxu0
        %748 = vmatprep.mubr.f32.mxu0 0.0
        %749 = vmatmul.mubr.f32.gmra.mxu0 %v552
        %v750 = vpop.f32.mrf.mxu0
        %v751 = vadd.f32 0.0, %v750
        %v752 = vpop.f32.mrf.mxu0
        %753 = vmatprep.mubr.f32.mxu0 0.0
        %754 = vmatmul.mubr.f32.gmra.mxu0 %v553
        %v755 = vpop.f32.mrf.mxu0
        %v756 = vadd.f32 0.0, %v755
        %v757 = vpop.f32.mrf.mxu0
        %758 = vmatprep.mubr.f32.mxu0 0.0
        %759 = vmatmul.mubr.f32.gmra.mxu0 %v554
        %v760 = vpop.f32.mrf.mxu0
        %v761 = vadd.f32 0.0, %v760
        %v762 = vpop.f32.mrf.mxu0
        %763 = vmatprep.mubr.f32.mxu0 0.0
        %764 = vmatmul.mubr.f32.gmra.mxu0 %v555
        %v765 = vpop.f32.mrf.mxu0
        %v766 = vadd.f32 0.0, %v765
        %v767 = vpop.f32.mrf.mxu0
        %768 = vmatprep.mubr.f32.mxu0 0.0
        %769 = vmatmul.mubr.f32.gmra.mxu0 %v556
        %v770 = vpop.f32.mrf.mxu0
        %v771 = vadd.f32 0.0, %v770
        %v772 = vpop.f32.mrf.mxu0
        %773 = vmatprep.mubr.f32.mxu0 0.0
        %774 = vmatmul.mubr.f32.gmra.mxu0 %v557
        %v775 = vpop.f32.mrf.mxu0
        %v776 = vadd.f32 0.0, %v775
        %v777 = vpop.f32.mrf.mxu0
        %778 = vmatprep.mubr.f32.mxu0 0.0
        %779 = vmatmul.mubr.f32.gmra.mxu0 %v558
        %v780 = vpop.f32.mrf.mxu0
        %v781 = vadd.f32 0.0, %v780
        %v782 = vpop.f32.mrf.mxu0
        %783 = vmatprep.mubr.f32.mxu0 0.0
        %784 = vmatmul.mubr.f32.gmra.mxu0 %v559
        %v785 = vpop.f32.mrf.mxu0
        %v786 = vadd.f32 0.0, %v785
        %v787 = vpop.f32.mrf.mxu0
        %788 = vmatprep.mubr.f32.mxu0 0.0
        %789 = vmatmul.mubr.f32.gmra.mxu0 %v560
        %v790 = vpop.f32.mrf.mxu0
        %v791 = vadd.f32 0.0, %v790
        %v792 = vpop.f32.mrf.mxu0
        %793 = vmatprep.mubr.f32.mxu0 0.0
        %794 = vmatmul.mubr.f32.gmra.mxu0 %v561
        %v795 = vpop.f32.mrf.mxu0
        %v796 = vadd.f32 0.0, %v795
        %v797 = vpop.f32.mrf.mxu0
        %798 = vmatprep.mubr.f32.mxu0 0.0
        %799 = vmatmul.mubr.f32.gmra.mxu0 %v562
        %v800 = vpop.f32.mrf.mxu0
        %v801 = vadd.f32 0.0, %v800
        %v802 = vpop.f32.mrf.mxu0
        %803 = vmatprep.mubr.f32.mxu0 0.0
        %804 = vmatmul.mubr.f32.gmra.mxu0 %v563
        %v805 = vpop.f32.mrf.mxu0
        %v806 = vadd.f32 0.0, %v805
        %v807 = vpop.f32.mrf.mxu0
        %808 = vmatprep.mubr.f32.mxu0 0.0
        %809 = vmatmul.mubr.f32.gmra.mxu0 %v564
        %v810 = vpop.f32.mrf.mxu0
        %v811 = vadd.f32 0.0, %v810
        %v812 = vpop.f32.mrf.mxu0
        %813 = vmatprep.mubr.f32.mxu0 0.0
        %814 = vmatmul.mubr.f32.gmra.mxu0 %v565
        %v815 = vpop.f32.mrf.mxu0
        %v816 = vadd.f32 0.0, %v815
        %v817 = vpop.f32.mrf.mxu0
        %818 = vmatprep.mubr.f32.mxu0 0.0
        %819 = vmatmul.mubr.f32.gmra.mxu0 %v566
        %v820 = vpop.f32.mrf.mxu0
        %v821 = vadd.f32 0.0, %v820
        %v822 = vpop.f32.mrf.mxu0
        %823 = vdwg.mxu0
        %824 = vmatprep.subr.mxu0 0.0
        %825 = vmatpush1.msra.mxu0 %v614
        %826 = vmatprep.subr.mxu0 0.0
        %827 = vmatpush1.msra.mxu0 %v613
        %828 = vmatprep.subr.mxu0 0.0
        %829 = vmatpush1.msra.mxu0 %v612
        %830 = vmatprep.subr.mxu0 0.0
        %831 = vmatpush1.msra.mxu0 %v611
        %832 = vmatprep.subr.mxu0 0.0
        %833 = vmatpush1.msra.mxu0 %v610
        %834 = vmatprep.subr.mxu0 0.0
        %835 = vmatpush1.msra.mxu0 %v609
        %836 = vmatprep.subr.mxu0 0.0
        %837 = vmatpush1.msra.mxu0 %v608
        %838 = vmatprep.subr.mxu0 0.0
        %839 = vmatpush1.msra.mxu0 %v607
        %840 = vmatprep.subr.mxu0 0.0
        %841 = vmatpush1.msra.mxu0 %v606
        %842 = vmatprep.subr.mxu0 0.0
        %843 = vmatpush1.msra.mxu0 %v605
        %844 = vmatprep.subr.mxu0 0.0
        %845 = vmatpush1.msra.mxu0 %v604
        %846 = vmatprep.subr.mxu0 0.0
        %847 = vmatpush1.msra.mxu0 %v603
        %848 = vmatprep.subr.mxu0 0.0
        %849 = vmatpush1.msra.mxu0 %v602
        %850 = vmatprep.subr.mxu0 0.0
        %851 = vmatpush1.msra.mxu0 %v601
        %852 = vmatprep.subr.mxu0 0.0
        %853 = vmatpush1.msra.mxu0 %v600
        %854 = vmatprep.subr.mxu0 0.0
        %855 = vmatpush1.msra.mxu0 %v599
        %856 = vmatprep.subr.mxu0 0.0
        %857 = vmatpush2.msra.mxu0 0.0
        %858 = vmatprep.subr.mxu0 0.0
        %859 = vmatpush2.msra.mxu0 0.0
        %860 = vmatprep.subr.mxu0 0.0
        %861 = vmatpush2.msra.mxu0 0.0
        %862 = vmatprep.subr.mxu0 0.0
        %863 = vmatpush2.msra.mxu0 0.0
        %864 = vmatprep.subr.mxu0 0.0
        %865 = vmatpush2.msra.mxu0 0.0
        %866 = vmatprep.subr.mxu0 0.0
        %867 = vmatpush2.msra.mxu0 0.0
        %868 = vmatprep.subr.mxu0 0.0
        %869 = vmatpush2.msra.mxu0 0.0
        %870 = vmatprep.subr.mxu0 0.0
        %871 = vmatpush2.msra.mxu0 0.0
        %872 = vmatprep.subr.mxu0 0.0
        %873 = vmatpush2.msra.mxu0 0.0
        %874 = vmatprep.subr.mxu0 0.0
        %875 = vmatpush2.msra.mxu0 0.0
        %876 = vmatprep.subr.mxu0 0.0
        %877 = vmatpush2.msra.mxu0 0.0
        %878 = vmatprep.subr.mxu0 0.0
        %879 = vmatpush2.msra.mxu0 0.0
        %880 = vmatprep.subr.mxu0 0.0
        %881 = vmatpush2.msra.mxu0 0.0
        %882 = vmatprep.subr.mxu0 0.0
        %883 = vmatpush2.msra.mxu0 0.0
        %884 = vmatprep.subr.mxu0 0.0
        %885 = vmatpush2.msra.mxu0 0.0
        %886 = vmatprep.subr.mxu0 0.0
        %887 = vmatpush2.msra.mxu0 0.0
        %888 = vmatprep.mubr.f32.mxu0 0.0
        %889 = vmatmul.mubr.f32.gmra.mxu0 %v567
        %v890 = vpop.f32.mrf.mxu0
        %v891 = vadd.f32 0.0, %v890
        %v892 = vpop.f32.mrf.mxu0
        %893 = vmatprep.mubr.f32.mxu0 0.0
        %894 = vmatmul.mubr.f32.gmra.mxu0 %v568
        %v895 = vpop.f32.mrf.mxu0
        %v896 = vadd.f32 0.0, %v895
        %v897 = vpop.f32.mrf.mxu0
        %898 = vmatprep.mubr.f32.mxu0 0.0
        %899 = vmatmul.mubr.f32.gmra.mxu0 %v569
        %v900 = vpop.f32.mrf.mxu0
        %v901 = vadd.f32 0.0, %v900
        %v902 = vpop.f32.mrf.mxu0
        %903 = vmatprep.mubr.f32.mxu0 0.0
        %904 = vmatmul.mubr.f32.gmra.mxu0 %v570
        %v905 = vpop.f32.mrf.mxu0
        %v906 = vadd.f32 0.0, %v905
        %v907 = vpop.f32.mrf.mxu0
        %908 = vmatprep.mubr.f32.mxu0 0.0
        %909 = vmatmul.mubr.f32.gmra.mxu0 %v571
        %v910 = vpop.f32.mrf.mxu0
        %v911 = vadd.f32 0.0, %v910
        %v912 = vpop.f32.mrf.mxu0
        %913 = vmatprep.mubr.f32.mxu0 0.0
        %914 = vmatmul.mubr.f32.gmra.mxu0 %v572
        %v915 = vpop.f32.mrf.mxu0
        %v916 = vadd.f32 0.0, %v915
        %v917 = vpop.f32.mrf.mxu0
        %918 = vmatprep.mubr.f32.mxu0 0.0
        %919 = vmatmul.mubr.f32.gmra.mxu0 %v573
        %v920 = vpop.f32.mrf.mxu0
        %v921 = vadd.f32 0.0, %v920
        %v922 = vpop.f32.mrf.mxu0
        %923 = vmatprep.mubr.f32.mxu0 0.0
        %924 = vmatmul.mubr.f32.gmra.mxu0 %v574
        %v925 = vpop.f32.mrf.mxu0
        %v926 = vadd.f32 0.0, %v925
        %v927 = vpop.f32.mrf.mxu0
        %928 = vmatprep.mubr.f32.mxu0 0.0
        %929 = vmatmul.mubr.f32.gmra.mxu0 %v575
        %v930 = vpop.f32.mrf.mxu0
        %v931 = vadd.f32 0.0, %v930
        %v932 = vpop.f32.mrf.mxu0
        %933 = vmatprep.mubr.f32.mxu0 0.0
        %934 = vmatmul.mubr.f32.gmra.mxu0 %v576
        %v935 = vpop.f32.mrf.mxu0
        %v936 = vadd.f32 0.0, %v935
        %v937 = vpop.f32.mrf.mxu0
        %938 = vmatprep.mubr.f32.mxu0 0.0
        %939 = vmatmul.mubr.f32.gmra.mxu0 %v577
        %v940 = vpop.f32.mrf.mxu0
        %v941 = vadd.f32 0.0, %v940
        %v942 = vpop.f32.mrf.mxu0
        %943 = vmatprep.mubr.f32.mxu0 0.0
        %944 = vmatmul.mubr.f32.gmra.mxu0 %v578
        %v945 = vpop.f32.mrf.mxu0
        %v946 = vadd.f32 0.0, %v945
        %v947 = vpop.f32.mrf.mxu0
        %948 = vmatprep.mubr.f32.mxu0 0.0
        %949 = vmatmul.mubr.f32.gmra.mxu0 %v579
        %v950 = vpop.f32.mrf.mxu0
        %v951 = vadd.f32 0.0, %v950
        %v952 = vpop.f32.mrf.mxu0
        %953 = vmatprep.mubr.f32.mxu0 0.0
        %954 = vmatmul.mubr.f32.gmra.mxu0 %v580
        %v955 = vpop.f32.mrf.mxu0
        %v956 = vadd.f32 0.0, %v955
        %v957 = vpop.f32.mrf.mxu0
        %958 = vmatprep.mubr.f32.mxu0 0.0
        %959 = vmatmul.mubr.f32.gmra.mxu0 %v581
        %v960 = vpop.f32.mrf.mxu0
        %v961 = vadd.f32 0.0, %v960
        %v962 = vpop.f32.mrf.mxu0
        %963 = vmatprep.mubr.f32.mxu0 0.0
        %964 = vmatmul.mubr.f32.gmra.mxu0 %v582
        %v965 = vpop.f32.mrf.mxu0
        %v966 = vadd.f32 0.0, %v965
        %v967 = vpop.f32.mrf.mxu0
        %968 = vdwg.mxu0
        %969 = vmatprep.subr.mxu0 0.0
        %970 = vmatpush1.msra.mxu0 %v662
        %971 = vmatprep.subr.mxu0 0.0
        %972 = vmatpush1.msra.mxu0 %v661
        %973 = vmatprep.subr.mxu0 0.0
        %974 = vmatpush1.msra.mxu0 %v660
        %975 = vmatprep.subr.mxu0 0.0
        %976 = vmatpush1.msra.mxu0 %v659
        %977 = vmatprep.subr.mxu0 0.0
        %978 = vmatpush1.msra.mxu0 %v658
        %979 = vmatprep.subr.mxu0 0.0
        %980 = vmatpush1.msra.mxu0 %v657
        %981 = vmatprep.subr.mxu0 0.0
        %982 = vmatpush1.msra.mxu0 %v656
        %983 = vmatprep.subr.mxu0 0.0
        %984 = vmatpush1.msra.mxu0 %v655
        %985 = vmatprep.subr.mxu0 0.0
        %986 = vmatpush1.msra.mxu0 %v654
        %987 = vmatprep.subr.mxu0 0.0
        %988 = vmatpush1.msra.mxu0 %v653
        %989 = vmatprep.subr.mxu0 0.0
        %990 = vmatpush1.msra.mxu0 %v652
        %991 = vmatprep.subr.mxu0 0.0
        %992 = vmatpush1.msra.mxu0 %v651
        %993 = vmatprep.subr.mxu0 0.0
        %994 = vmatpush1.msra.mxu0 %v650
        %995 = vmatprep.subr.mxu0 0.0
        %996 = vmatpush1.msra.mxu0 %v649
        %997 = vmatprep.subr.mxu0 0.0
        %998 = vmatpush1.msra.mxu0 %v648
        %999 = vmatprep.subr.mxu0 0.0
        %1000 = vmatpush1.msra.mxu0 %v647
        %1001 = vmatprep.subr.mxu0 0.0
        %1002 = vmatpush2.msra.mxu0 0.0
        %1003 = vmatprep.subr.mxu0 0.0
        %1004 = vmatpush2.msra.mxu0 0.0
        %1005 = vmatprep.subr.mxu0 0.0
        %1006 = vmatpush2.msra.mxu0 0.0
        %1007 = vmatprep.subr.mxu0 0.0
        %1008 = vmatpush2.msra.mxu0 0.0
        %1009 = vmatprep.subr.mxu0 0.0
        %1010 = vmatpush2.msra.mxu0 0.0
        %1011 = vmatprep.subr.mxu0 0.0
        %1012 = vmatpush2.msra.mxu0 0.0
        %1013 = vmatprep.subr.mxu0 0.0
        %1014 = vmatpush2.msra.mxu0 0.0
        %1015 = vmatprep.subr.mxu0 0.0
        %1016 = vmatpush2.msra.mxu0 0.0
        %1017 = vmatprep.subr.mxu0 0.0
        %1018 = vmatpush2.msra.mxu0 0.0
        %1019 = vmatprep.subr.mxu0 0.0
        %1020 = vmatpush2.msra.mxu0 0.0
        %1021 = vmatprep.subr.mxu0 0.0
        %1022 = vmatpush2.msra.mxu0 0.0
        %1023 = vmatprep.subr.mxu0 0.0
        %1024 = vmatpush2.msra.mxu0 0.0
        %1025 = vmatprep.subr.mxu0 0.0
        %1026 = vmatpush2.msra.mxu0 0.0
        %1027 = vmatprep.subr.mxu0 0.0
        %1028 = vmatpush2.msra.mxu0 0.0
        %1029 = vmatprep.subr.mxu0 0.0
        %1030 = vmatpush2.msra.mxu0 0.0
        %1031 = vmatprep.subr.mxu0 0.0
        %1032 = vmatpush2.msra.mxu0 0.0
        %1033 = vmatprep.mubr.f32.mxu0 0.0
        %1034 = vmatmul.mubr.f32.gmra.mxu0 %v615
        %v1035 = vpop.f32.mrf.mxu0
        %v1036 = vadd.f32 0.0, %v1035
        %v1037 = vpop.f32.mrf.mxu0
        %1038 = vmatprep.mubr.f32.mxu0 0.0
        %1039 = vmatmul.mubr.f32.gmra.mxu0 %v616
        %v1040 = vpop.f32.mrf.mxu0
        %v1041 = vadd.f32 0.0, %v1040
        %v1042 = vpop.f32.mrf.mxu0
        %1043 = vmatprep.mubr.f32.mxu0 0.0
        %1044 = vmatmul.mubr.f32.gmra.mxu0 %v617
        %v1045 = vpop.f32.mrf.mxu0
        %v1046 = vadd.f32 0.0, %v1045
        %v1047 = vpop.f32.mrf.mxu0
        %1048 = vmatprep.mubr.f32.mxu0 0.0
        %1049 = vmatmul.mubr.f32.gmra.mxu0 %v618
        %v1050 = vpop.f32.mrf.mxu0
        %v1051 = vadd.f32 0.0, %v1050
        %v1052 = vpop.f32.mrf.mxu0
        %1053 = vmatprep.mubr.f32.mxu0 0.0
        %1054 = vmatmul.mubr.f32.gmra.mxu0 %v619
        %v1055 = vpop.f32.mrf.mxu0
        %v1056 = vadd.f32 0.0, %v1055
        %v1057 = vpop.f32.mrf.mxu0
        %1058 = vmatprep.mubr.f32.mxu0 0.0
        %1059 = vmatmul.mubr.f32.gmra.mxu0 %v620
        %v1060 = vpop.f32.mrf.mxu0
        %v1061 = vadd.f32 0.0, %v1060
        %v1062 = vpop.f32.mrf.mxu0
        %1063 = vmatprep.mubr.f32.mxu0 0.0
        %1064 = vmatmul.mubr.f32.gmra.mxu0 %v621
        %v1065 = vpop.f32.mrf.mxu0
        %v1066 = vadd.f32 0.0, %v1065
        %v1067 = vpop.f32.mrf.mxu0
        %1068 = vmatprep.mubr.f32.mxu0 0.0
        %1069 = vmatmul.mubr.f32.gmra.mxu0 %v622
        %v1070 = vpop.f32.mrf.mxu0
        %v1071 = vadd.f32 0.0, %v1070
        %v1072 = vpop.f32.mrf.mxu0
        %1073 = vmatprep.mubr.f32.mxu0 0.0
        %1074 = vmatmul.mubr.f32.gmra.mxu0 %v623
        %v1075 = vpop.f32.mrf.mxu0
        %v1076 = vadd.f32 0.0, %v1075
        %v1077 = vpop.f32.mrf.mxu0
        %1078 = vmatprep.mubr.f32.mxu0 0.0
        %1079 = vmatmul.mubr.f32.gmra.mxu0 %v624
        %v1080 = vpop.f32.mrf.mxu0
        %v1081 = vadd.f32 0.0, %v1080
        %v1082 = vpop.f32.mrf.mxu0
        %1083 = vmatprep.mubr.f32.mxu0 0.0
        %1084 = vmatmul.mubr.f32.gmra.mxu0 %v625
        %v1085 = vpop.f32.mrf.mxu0
        %v1086 = vadd.f32 0.0, %v1085
        %v1087 = vpop.f32.mrf.mxu0
        %1088 = vmatprep.mubr.f32.mxu0 0.0
        %1089 = vmatmul.mubr.f32.gmra.mxu0 %v626
        %v1090 = vpop.f32.mrf.mxu0
        %v1091 = vadd.f32 0.0, %v1090
        %v1092 = vpop.f32.mrf.mxu0
        %1093 = vmatprep.mubr.f32.mxu0 0.0
        %1094 = vmatmul.mubr.f32.gmra.mxu0 %v627
        %v1095 = vpop.f32.mrf.mxu0
        %v1096 = vadd.f32 0.0, %v1095
        %v1097 = vpop.f32.mrf.mxu0
        %1098 = vmatprep.mubr.f32.mxu0 0.0
        %1099 = vmatmul.mubr.f32.gmra.mxu0 %v628
        %v1100 = vpop.f32.mrf.mxu0
        %v1101 = vadd.f32 0.0, %v1100
        %v1102 = vpop.f32.mrf.mxu0
        %1103 = vmatprep.mubr.f32.mxu0 0.0
        %1104 = vmatmul.mubr.f32.gmra.mxu0 %v629
        %v1105 = vpop.f32.mrf.mxu0
        %v1106 = vadd.f32 0.0, %v1105
        %v1107 = vpop.f32.mrf.mxu0
        %1108 = vmatprep.mubr.f32.mxu0 0.0
        %1109 = vmatmul.mubr.f32.gmra.mxu0 %v630
        %v1110 = vpop.f32.mrf.mxu0
        %v1111 = vadd.f32 0.0, %v1110
        %v1112 = vpop.f32.mrf.mxu0
        %1113 = vdwg.mxu0
        %1114 = vmatprep.subr.mxu0 0.0
        %1115 = vmatpush1.msra.mxu0 %v678
        %1116 = vmatprep.subr.mxu0 0.0
        %1117 = vmatpush1.msra.mxu0 %v677
        %1118 = vmatprep.subr.mxu0 0.0
        %1119 = vmatpush1.msra.mxu0 %v676
        %1120 = vmatprep.subr.mxu0 0.0
        %1121 = vmatpush1.msra.mxu0 %v675
        %1122 = vmatprep.subr.mxu0 0.0
        %1123 = vmatpush1.msra.mxu0 %v674
        %1124 = vmatprep.subr.mxu0 0.0
        %1125 = vmatpush1.msra.mxu0 %v673
        %1126 = vmatprep.subr.mxu0 0.0
        %1127 = vmatpush1.msra.mxu0 %v672
        %1128 = vmatprep.subr.mxu0 0.0
        %1129 = vmatpush1.msra.mxu0 %v671
        %1130 = vmatprep.subr.mxu0 0.0
        %1131 = vmatpush1.msra.mxu0 %v670
        %1132 = vmatprep.subr.mxu0 0.0
        %1133 = vmatpush1.msra.mxu0 %v669
        %1134 = vmatprep.subr.mxu0 0.0
        %1135 = vmatpush1.msra.mxu0 %v668
        %1136 = vmatprep.subr.mxu0 0.0
        %1137 = vmatpush1.msra.mxu0 %v667
        %1138 = vmatprep.subr.mxu0 0.0
        %1139 = vmatpush1.msra.mxu0 %v666
        %1140 = vmatprep.subr.mxu0 0.0
        %1141 = vmatpush1.msra.mxu0 %v665
        %1142 = vmatprep.subr.mxu0 0.0
        %1143 = vmatpush1.msra.mxu0 %v664
        %1144 = vmatprep.subr.mxu0 0.0
        %1145 = vmatpush1.msra.mxu0 %v663
        %1146 = vmatprep.subr.mxu0 0.0
        %1147 = vmatpush2.msra.mxu0 0.0
        %1148 = vmatprep.subr.mxu0 0.0
        %1149 = vmatpush2.msra.mxu0 0.0
        %1150 = vmatprep.subr.mxu0 0.0
        %1151 = vmatpush2.msra.mxu0 0.0
        %1152 = vmatprep.subr.mxu0 0.0
        %1153 = vmatpush2.msra.mxu0 0.0
        %1154 = vmatprep.subr.mxu0 0.0
        %1155 = vmatpush2.msra.mxu0 0.0
        %1156 = vmatprep.subr.mxu0 0.0
        %1157 = vmatpush2.msra.mxu0 0.0
        %1158 = vmatprep.subr.mxu0 0.0
        %1159 = vmatpush2.msra.mxu0 0.0
        %1160 = vmatprep.subr.mxu0 0.0
        %1161 = vmatpush2.msra.mxu0 0.0
        %1162 = vmatprep.subr.mxu0 0.0
        %1163 = vmatpush2.msra.mxu0 0.0
        %1164 = vmatprep.subr.mxu0 0.0
        %1165 = vmatpush2.msra.mxu0 0.0
        %1166 = vmatprep.subr.mxu0 0.0
        %1167 = vmatpush2.msra.mxu0 0.0
        %1168 = vmatprep.subr.mxu0 0.0
        %1169 = vmatpush2.msra.mxu0 0.0
        %1170 = vmatprep.subr.mxu0 0.0
        %1171 = vmatpush2.msra.mxu0 0.0
        %1172 = vmatprep.subr.mxu0 0.0
        %1173 = vmatpush2.msra.mxu0 0.0
        %1174 = vmatprep.subr.mxu0 0.0
        %1175 = vmatpush2.msra.mxu0 0.0
        %1176 = vmatprep.subr.mxu0 0.0
        %1177 = vmatpush2.msra.mxu0 0.0
        %1178 = vmatprep.mubr.f32.mxu0 0.0
        %1179 = vmatmul.mubr.f32.gmra.mxu0 %v631
        %v1180 = vpop.f32.mrf.mxu0
        %v1181 = vadd.f32 0.0, %v1180
        %v1182 = vpop.f32.mrf.mxu0
        %1183 = vmatprep.mubr.f32.mxu0 0.0
        %1184 = vmatmul.mubr.f32.gmra.mxu0 %v632
        %v1185 = vpop.f32.mrf.mxu0
        %v1186 = vadd.f32 0.0, %v1185
        %v1187 = vpop.f32.mrf.mxu0
        %1188 = vmatprep.mubr.f32.mxu0 0.0
        %1189 = vmatmul.mubr.f32.gmra.mxu0 %v633
        %v1190 = vpop.f32.mrf.mxu0
        %v1191 = vadd.f32 0.0, %v1190
        %v1192 = vpop.f32.mrf.mxu0
        %1193 = vmatprep.mubr.f32.mxu0 0.0
        %1194 = vmatmul.mubr.f32.gmra.mxu0 %v634
        %v1195 = vpop.f32.mrf.mxu0
        %v1196 = vadd.f32 0.0, %v1195
        %v1197 = vpop.f32.mrf.mxu0
        %1198 = vmatprep.mubr.f32.mxu0 0.0
        %1199 = vmatmul.mubr.f32.gmra.mxu0 %v635
        %v1200 = vpop.f32.mrf.mxu0
        %v1201 = vadd.f32 0.0, %v1200
        %v1202 = vpop.f32.mrf.mxu0
        %1203 = vmatprep.mubr.f32.mxu0 0.0
        %1204 = vmatmul.mubr.f32.gmra.mxu0 %v636
        %v1205 = vpop.f32.mrf.mxu0
        %v1206 = vadd.f32 0.0, %v1205
        %v1207 = vpop.f32.mrf.mxu0
        %1208 = vmatprep.mubr.f32.mxu0 0.0
        %1209 = vmatmul.mubr.f32.gmra.mxu0 %v637
        %v1210 = vpop.f32.mrf.mxu0
        %v1211 = vadd.f32 0.0, %v1210
        %v1212 = vpop.f32.mrf.mxu0
        %1213 = vmatprep.mubr.f32.mxu0 0.0
        %1214 = vmatmul.mubr.f32.gmra.mxu0 %v638
        %v1215 = vpop.f32.mrf.mxu0
        %v1216 = vadd.f32 0.0, %v1215
        %v1217 = vpop.f32.mrf.mxu0
        %1218 = vmatprep.mubr.f32.mxu0 0.0
        %1219 = vmatmul.mubr.f32.gmra.mxu0 %v639
        %v1220 = vpop.f32.mrf.mxu0
        %v1221 = vadd.f32 0.0, %v1220
        %v1222 = vpop.f32.mrf.mxu0
        %1223 = vmatprep.mubr.f32.mxu0 0.0
        %1224 = vmatmul.mubr.f32.gmra.mxu0 %v640
        %v1225 = vpop.f32.mrf.mxu0
        %v1226 = vadd.f32 0.0, %v1225
        %v1227 = vpop.f32.mrf.mxu0
        %1228 = vmatprep.mubr.f32.mxu0 0.0
        %1229 = vmatmul.mubr.f32.gmra.mxu0 %v641
        %v1230 = vpop.f32.mrf.mxu0
        %v1231 = vadd.f32 0.0, %v1230
        %v1232 = vpop.f32.mrf.mxu0
        %1233 = vmatprep.mubr.f32.mxu0 0.0
        %1234 = vmatmul.mubr.f32.gmra.mxu0 %v642
        %v1235 = vpop.f32.mrf.mxu0
        %v1236 = vadd.f32 0.0, %v1235
        %v1237 = vpop.f32.mrf.mxu0
        %1238 = vmatprep.mubr.f32.mxu0 0.0
        %1239 = vmatmul.mubr.f32.gmra.mxu0 %v643
        %v1240 = vpop.f32.mrf.mxu0
        %v1241 = vadd.f32 0.0, %v1240
        %v1242 = vpop.f32.mrf.mxu0
        %1243 = vmatprep.mubr.f32.mxu0 0.0
        %1244 = vmatmul.mubr.f32.gmra.mxu0 %v644
        %v1245 = vpop.f32.mrf.mxu0
        %v1246 = vadd.f32 0.0, %v1245
        %v1247 = vpop.f32.mrf.mxu0
        %1248 = vmatprep.mubr.f32.mxu0 0.0
        %1249 = vmatmul.mubr.f32.gmra.mxu0 %v645
        %v1250 = vpop.f32.mrf.mxu0
        %v1251 = vadd.f32 0.0, %v1250
        %v1252 = vpop.f32.mrf.mxu0
        %1253 = vmatprep.mubr.f32.mxu0 0.0
        %1254 = vmatmul.mubr.f32.gmra.mxu0 %v646
        %v1255 = vpop.f32.mrf.mxu0
        %v1256 = vadd.f32 0.0, %v1255
        %v1257 = vpop.f32.mrf.mxu0
        %1258 = vdwg.mxu0
        %1259 = vmatprep.subr.mxu0 0.0
        %1260 = vmatpush1.msra.mxu0 %v1111
        %1261 = vmatprep.subr.mxu0 0.0
        %1262 = vmatpush1.msra.mxu0 %v1106
        %1263 = vmatprep.subr.mxu0 0.0
        %1264 = vmatpush1.msra.mxu0 %v1101
        %1265 = vmatprep.subr.mxu0 0.0
        %1266 = vmatpush1.msra.mxu0 %v1096
        %1267 = vmatprep.subr.mxu0 0.0
        %1268 = vmatpush1.msra.mxu0 %v1091
        %1269 = vmatprep.subr.mxu0 0.0
        %1270 = vmatpush1.msra.mxu0 %v1086
        %1271 = vmatprep.subr.mxu0 0.0
        %1272 = vmatpush1.msra.mxu0 %v1081
        %1273 = vmatprep.subr.mxu0 0.0
        %1274 = vmatpush1.msra.mxu0 %v1076
        %1275 = vmatprep.subr.mxu0 0.0
        %1276 = vmatpush1.msra.mxu0 %v1071
        %1277 = vmatprep.subr.mxu0 0.0
        %1278 = vmatpush1.msra.mxu0 %v1066
        %1279 = vmatprep.subr.mxu0 0.0
        %1280 = vmatpush1.msra.mxu0 %v1061
        %1281 = vmatprep.subr.mxu0 0.0
        %1282 = vmatpush1.msra.mxu0 %v1056
        %1283 = vmatprep.subr.mxu0 0.0
        %1284 = vmatpush1.msra.mxu0 %v1051
        %1285 = vmatprep.subr.mxu0 0.0
        %1286 = vmatpush1.msra.mxu0 %v1046
        %1287 = vmatprep.subr.mxu0 0.0
        %1288 = vmatpush1.msra.mxu0 %v1041
        %1289 = vmatprep.subr.mxu0 0.0
        %1290 = vmatpush1.msra.mxu0 %v1036
        %1291 = vmatprep.subr.mxu0 0.0
        %1292 = vmatpush2.msra.mxu0 0.0
        %1293 = vmatprep.subr.mxu0 0.0
        %1294 = vmatpush2.msra.mxu0 0.0
        %1295 = vmatprep.subr.mxu0 0.0
        %1296 = vmatpush2.msra.mxu0 0.0
        %1297 = vmatprep.subr.mxu0 0.0
        %1298 = vmatpush2.msra.mxu0 0.0
        %1299 = vmatprep.subr.mxu0 0.0
        %1300 = vmatpush2.msra.mxu0 0.0
        %1301 = vmatprep.subr.mxu0 0.0
        %1302 = vmatpush2.msra.mxu0 0.0
        %1303 = vmatprep.subr.mxu0 0.0
        %1304 = vmatpush2.msra.mxu0 0.0
        %1305 = vmatprep.subr.mxu0 0.0
        %1306 = vmatpush2.msra.mxu0 0.0
        %1307 = vmatprep.subr.mxu0 0.0
        %1308 = vmatpush2.msra.mxu0 0.0
        %1309 = vmatprep.subr.mxu0 0.0
        %1310 = vmatpush2.msra.mxu0 0.0
        %1311 = vmatprep.subr.mxu0 0.0
        %1312 = vmatpush2.msra.mxu0 0.0
        %1313 = vmatprep.subr.mxu0 0.0
        %1314 = vmatpush2.msra.mxu0 0.0
        %1315 = vmatprep.subr.mxu0 0.0
        %1316 = vmatpush2.msra.mxu0 0.0
        %1317 = vmatprep.subr.mxu0 0.0
        %1318 = vmatpush2.msra.mxu0 0.0
        %1319 = vmatprep.subr.mxu0 0.0
        %1320 = vmatpush2.msra.mxu0 0.0
        %1321 = vmatprep.subr.mxu0 0.0
        %1322 = vmatpush2.msra.mxu0 0.0
        %1323 = vmatprep.mubr.f32.mxu0 0.0
        %1324 = vmatmul.mubr.f32.gmra.mxu0 %v746
        %v1325 = vpop.f32.mrf.mxu0
        %v1326 = vadd.f32 0.0, %v1325
        %v1327 = vpop.f32.mrf.mxu0
        %1328 = vmatprep.mubr.f32.mxu0 0.0
        %1329 = vmatmul.mubr.f32.gmra.mxu0 %v751
        %v1330 = vpop.f32.mrf.mxu0
        %v1331 = vadd.f32 0.0, %v1330
        %v1332 = vpop.f32.mrf.mxu0
        %1333 = vmatprep.mubr.f32.mxu0 0.0
        %1334 = vmatmul.mubr.f32.gmra.mxu0 %v756
        %v1335 = vpop.f32.mrf.mxu0
        %v1336 = vadd.f32 0.0, %v1335
        %v1337 = vpop.f32.mrf.mxu0
        %1338 = vmatprep.mubr.f32.mxu0 0.0
        %1339 = vmatmul.mubr.f32.gmra.mxu0 %v761
        %v1340 = vpop.f32.mrf.mxu0
        %v1341 = vadd.f32 0.0, %v1340
        %v1342 = vpop.f32.mrf.mxu0
        %1343 = vmatprep.mubr.f32.mxu0 0.0
        %1344 = vmatmul.mubr.f32.gmra.mxu0 %v766
        %v1345 = vpop.f32.mrf.mxu0
        %v1346 = vadd.f32 0.0, %v1345
        %v1347 = vpop.f32.mrf.mxu0
        %1348 = vmatprep.mubr.f32.mxu0 0.0
        %1349 = vmatmul.mubr.f32.gmra.mxu0 %v771
        %v1350 = vpop.f32.mrf.mxu0
        %v1351 = vadd.f32 0.0, %v1350
        %v1352 = vpop.f32.mrf.mxu0
        %1353 = vmatprep.mubr.f32.mxu0 0.0
        %1354 = vmatmul.mubr.f32.gmra.mxu0 %v776
        %v1355 = vpop.f32.mrf.mxu0
        %v1356 = vadd.f32 0.0, %v1355
        %v1357 = vpop.f32.mrf.mxu0
        %1358 = vmatprep.mubr.f32.mxu0 0.0
        %1359 = vmatmul.mubr.f32.gmra.mxu0 %v781
        %v1360 = vpop.f32.mrf.mxu0
        %v1361 = vadd.f32 0.0, %v1360
        %v1362 = vpop.f32.mrf.mxu0
        %1363 = vmatprep.mubr.f32.mxu0 0.0
        %1364 = vmatmul.mubr.f32.gmra.mxu0 %v786
        %v1365 = vpop.f32.mrf.mxu0
        %v1366 = vadd.f32 0.0, %v1365
        %v1367 = vpop.f32.mrf.mxu0
        %1368 = vmatprep.mubr.f32.mxu0 0.0
        %1369 = vmatmul.mubr.f32.gmra.mxu0 %v791
        %v1370 = vpop.f32.mrf.mxu0
        %v1371 = vadd.f32 0.0, %v1370
        %v1372 = vpop.f32.mrf.mxu0
        %1373 = vmatprep.mubr.f32.mxu0 0.0
        %1374 = vmatmul.mubr.f32.gmra.mxu0 %v796
        %v1375 = vpop.f32.mrf.mxu0
        %v1376 = vadd.f32 0.0, %v1375
        %v1377 = vpop.f32.mrf.mxu0
        %1378 = vmatprep.mubr.f32.mxu0 0.0
        %1379 = vmatmul.mubr.f32.gmra.mxu0 %v801
        %v1380 = vpop.f32.mrf.mxu0
        %v1381 = vadd.f32 0.0, %v1380
        %v1382 = vpop.f32.mrf.mxu0
        %1383 = vmatprep.mubr.f32.mxu0 0.0
        %1384 = vmatmul.mubr.f32.gmra.mxu0 %v806
        %v1385 = vpop.f32.mrf.mxu0
        %v1386 = vadd.f32 0.0, %v1385
        %v1387 = vpop.f32.mrf.mxu0
        %1388 = vmatprep.mubr.f32.mxu0 0.0
        %1389 = vmatmul.mubr.f32.gmra.mxu0 %v811
        %v1390 = vpop.f32.mrf.mxu0
        %v1391 = vadd.f32 0.0, %v1390
        %v1392 = vpop.f32.mrf.mxu0
        %1393 = vmatprep.mubr.f32.mxu0 0.0
        %1394 = vmatmul.mubr.f32.gmra.mxu0 %v816
        %v1395 = vpop.f32.mrf.mxu0
        %v1396 = vadd.f32 0.0, %v1395
        %v1397 = vpop.f32.mrf.mxu0
        %1398 = vmatprep.mubr.f32.mxu0 0.0
        %1399 = vmatmul.mubr.f32.gmra.mxu0 %v821
        %v1400 = vpop.f32.mrf.mxu0
        %v1401 = vadd.f32 0.0, %v1400
        %v1402 = vpop.f32.mrf.mxu0
        %1403 = vdwg.mxu0
        %1404 = vmatprep.subr.mxu0 0.0
        %1405 = vmatpush1.msra.mxu0 %v1256
        %1406 = vmatprep.subr.mxu0 0.0
        %1407 = vmatpush1.msra.mxu0 %v1251
        %1408 = vmatprep.subr.mxu0 0.0
        %1409 = vmatpush1.msra.mxu0 %v1246
        %1410 = vmatprep.subr.mxu0 0.0
        %1411 = vmatpush1.msra.mxu0 %v1241
        %1412 = vmatprep.subr.mxu0 0.0
        %1413 = vmatpush1.msra.mxu0 %v1236
        %1414 = vmatprep.subr.mxu0 0.0
        %1415 = vmatpush1.msra.mxu0 %v1231
        %1416 = vmatprep.subr.mxu0 0.0
        %1417 = vmatpush1.msra.mxu0 %v1226
        %1418 = vmatprep.subr.mxu0 0.0
        %1419 = vmatpush1.msra.mxu0 %v1221
        %1420 = vmatprep.subr.mxu0 0.0
        %1421 = vmatpush1.msra.mxu0 %v1216
        %1422 = vmatprep.subr.mxu0 0.0
        %1423 = vmatpush1.msra.mxu0 %v1211
        %1424 = vmatprep.subr.mxu0 0.0
        %1425 = vmatpush1.msra.mxu0 %v1206
        %1426 = vmatprep.subr.mxu0 0.0
        %1427 = vmatpush1.msra.mxu0 %v1201
        %1428 = vmatprep.subr.mxu0 0.0
        %1429 = vmatpush1.msra.mxu0 %v1196
        %1430 = vmatprep.subr.mxu0 0.0
        %1431 = vmatpush1.msra.mxu0 %v1191
        %1432 = vmatprep.subr.mxu0 0.0
        %1433 = vmatpush1.msra.mxu0 %v1186
        %1434 = vmatprep.subr.mxu0 0.0
        %1435 = vmatpush1.msra.mxu0 %v1181
        %1436 = vmatprep.subr.mxu0 0.0
        %1437 = vmatpush2.msra.mxu0 0.0
        %1438 = vmatprep.subr.mxu0 0.0
        %1439 = vmatpush2.msra.mxu0 0.0
        %1440 = vmatprep.subr.mxu0 0.0
        %1441 = vmatpush2.msra.mxu0 0.0
        %1442 = vmatprep.subr.mxu0 0.0
        %1443 = vmatpush2.msra.mxu0 0.0
        %1444 = vmatprep.subr.mxu0 0.0
        %1445 = vmatpush2.msra.mxu0 0.0
        %1446 = vmatprep.subr.mxu0 0.0
        %1447 = vmatpush2.msra.mxu0 0.0
        %1448 = vmatprep.subr.mxu0 0.0
        %1449 = vmatpush2.msra.mxu0 0.0
        %1450 = vmatprep.subr.mxu0 0.0
        %1451 = vmatpush2.msra.mxu0 0.0
        %1452 = vmatprep.subr.mxu0 0.0
        %1453 = vmatpush2.msra.mxu0 0.0
        %1454 = vmatprep.subr.mxu0 0.0
        %1455 = vmatpush2.msra.mxu0 0.0
        %1456 = vmatprep.subr.mxu0 0.0
        %1457 = vmatpush2.msra.mxu0 0.0
        %1458 = vmatprep.subr.mxu0 0.0
        %1459 = vmatpush2.msra.mxu0 0.0
        %1460 = vmatprep.subr.mxu0 0.0
        %1461 = vmatpush2.msra.mxu0 0.0
        %1462 = vmatprep.subr.mxu0 0.0
        %1463 = vmatpush2.msra.mxu0 0.0
        %1464 = vmatprep.subr.mxu0 0.0
        %1465 = vmatpush2.msra.mxu0 0.0
        %1466 = vmatprep.subr.mxu0 0.0
        %1467 = vmatpush2.msra.mxu0 0.0
        %1468 = vmatprep.mubr.f32.mxu0 0.0
        %1469 = vmatmul.mubr.f32.gmra.mxu0 %v891
        %v1470 = vpop.f32.mrf.mxu0
        %v1471 = vadd.f32 0.0, %v1470
        %v1472 = vpop.f32.mrf.mxu0
        %1473 = vmatprep.mubr.f32.mxu0 0.0
        %1474 = vmatmul.mubr.f32.gmra.mxu0 %v896
        %v1475 = vpop.f32.mrf.mxu0
        %v1476 = vadd.f32 0.0, %v1475
        %v1477 = vpop.f32.mrf.mxu0
        %1478 = vmatprep.mubr.f32.mxu0 0.0
        %1479 = vmatmul.mubr.f32.gmra.mxu0 %v901
        %v1480 = vpop.f32.mrf.mxu0
        %v1481 = vadd.f32 0.0, %v1480
        %v1482 = vpop.f32.mrf.mxu0
        %1483 = vmatprep.mubr.f32.mxu0 0.0
        %1484 = vmatmul.mubr.f32.gmra.mxu0 %v906
        %v1485 = vpop.f32.mrf.mxu0
        %v1486 = vadd.f32 0.0, %v1485
        %v1487 = vpop.f32.mrf.mxu0
        %1488 = vmatprep.mubr.f32.mxu0 0.0
        %1489 = vmatmul.mubr.f32.gmra.mxu0 %v911
        %v1490 = vpop.f32.mrf.mxu0
        %v1491 = vadd.f32 0.0, %v1490
        %v1492 = vpop.f32.mrf.mxu0
        %1493 = vmatprep.mubr.f32.mxu0 0.0
        %1494 = vmatmul.mubr.f32.gmra.mxu0 %v916
        %v1495 = vpop.f32.mrf.mxu0
        %v1496 = vadd.f32 0.0, %v1495
        %v1497 = vpop.f32.mrf.mxu0
        %1498 = vmatprep.mubr.f32.mxu0 0.0
        %1499 = vmatmul.mubr.f32.gmra.mxu0 %v921
        %v1500 = vpop.f32.mrf.mxu0
        %v1501 = vadd.f32 0.0, %v1500
        %v1502 = vpop.f32.mrf.mxu0
        %1503 = vmatprep.mubr.f32.mxu0 0.0
        %1504 = vmatmul.mubr.f32.gmra.mxu0 %v926
        %v1505 = vpop.f32.mrf.mxu0
        %v1506 = vadd.f32 0.0, %v1505
        %v1507 = vpop.f32.mrf.mxu0
        %1508 = vmatprep.mubr.f32.mxu0 0.0
        %1509 = vmatmul.mubr.f32.gmra.mxu0 %v931
        %v1510 = vpop.f32.mrf.mxu0
        %v1511 = vadd.f32 0.0, %v1510
        %v1512 = vpop.f32.mrf.mxu0
        %1513 = vmatprep.mubr.f32.mxu0 0.0
        %1514 = vmatmul.mubr.f32.gmra.mxu0 %v936
        %v1515 = vpop.f32.mrf.mxu0
        %v1516 = vadd.f32 0.0, %v1515
        %v1517 = vpop.f32.mrf.mxu0
        %1518 = vmatprep.mubr.f32.mxu0 0.0
        %1519 = vmatmul.mubr.f32.gmra.mxu0 %v941
        %v1520 = vpop.f32.mrf.mxu0
        %v1521 = vadd.f32 0.0, %v1520
        %v1522 = vpop.f32.mrf.mxu0
        %1523 = vmatprep.mubr.f32.mxu0 0.0
        %1524 = vmatmul.mubr.f32.gmra.mxu0 %v946
        %v1525 = vpop.f32.mrf.mxu0
        %v1526 = vadd.f32 0.0, %v1525
        %v1527 = vpop.f32.mrf.mxu0
        %1528 = vmatprep.mubr.f32.mxu0 0.0
        %1529 = vmatmul.mubr.f32.gmra.mxu0 %v951
        %v1530 = vpop.f32.mrf.mxu0
        %v1531 = vadd.f32 0.0, %v1530
        %v1532 = vpop.f32.mrf.mxu0
        %1533 = vmatprep.mubr.f32.mxu0 0.0
        %1534 = vmatmul.mubr.f32.gmra.mxu0 %v956
        %v1535 = vpop.f32.mrf.mxu0
        %v1536 = vadd.f32 0.0, %v1535
        %v1537 = vpop.f32.mrf.mxu0
        %1538 = vmatprep.mubr.f32.mxu0 0.0
        %1539 = vmatmul.mubr.f32.gmra.mxu0 %v961
        %v1540 = vpop.f32.mrf.mxu0
        %v1541 = vadd.f32 0.0, %v1540
        %v1542 = vpop.f32.mrf.mxu0
        %1543 = vmatprep.mubr.f32.mxu0 0.0
        %1544 = vmatmul.mubr.f32.gmra.mxu0 %v966
        %v1545 = vpop.f32.mrf.mxu0
        %v1546 = vadd.f32 0.0, %v1545
        %v1547 = vpop.f32.mrf.mxu0
        %1548 = vdwg.mxu0
        %v1549 = vmax.f32 %v1326, %v1471
        %v1550 = vmax.f32 %v1331, %v1476
        %v1551 = vmax.f32 %v1336, %v1481
        %v1552 = vmax.f32 %v1341, %v1486
        %v1553 = vmax.f32 %v1346, %v1491
        %v1554 = vmax.f32 %v1351, %v1496
        %v1555 = vmax.f32 %v1356, %v1501
        %v1556 = vmax.f32 %v1361, %v1506
        %v1557 = vmax.f32 %v1366, %v1511
        %v1558 = vmax.f32 %v1371, %v1516
        %v1559 = vmax.f32 %v1376, %v1521
        %v1560 = vmax.f32 %v1381, %v1526
        %v1561 = vmax.f32 %v1386, %v1531
        %v1562 = vmax.f32 %v1391, %v1536
        %v1563 = vmax.f32 %v1396, %v1541
        %v1564 = vmax.f32 %v1401, %v1546
        %v1565 = vsub.f32 %v1326, %v1549
        %v1566 = vsub.f32 %v1331, %v1550
        %v1567 = vsub.f32 %v1336, %v1551
        %v1568 = vsub.f32 %v1341, %v1552
        %v1569 = vsub.f32 %v1346, %v1553
        %v1570 = vsub.f32 %v1351, %v1554
        %v1571 = vsub.f32 %v1356, %v1555
        %v1572 = vsub.f32 %v1361, %v1556
        %v1573 = vsub.f32 %v1366, %v1557
        %v1574 = vsub.f32 %v1371, %v1558
        %v1575 = vsub.f32 %v1376, %v1559
        %v1576 = vsub.f32 %v1381, %v1560
        %v1577 = vsub.f32 %v1386, %v1561
        %v1578 = vsub.f32 %v1391, %v1562
        %v1579 = vsub.f32 %v1396, %v1563
        %v1580 = vsub.f32 %v1401, %v1564
        %v1581 = vsub.f32 %v1471, %v1549
        %v1582 = vsub.f32 %v1476, %v1550
        %v1583 = vsub.f32 %v1481, %v1551
        %v1584 = vsub.f32 %v1486, %v1552
        %v1585 = vsub.f32 %v1491, %v1553
        %v1586 = vsub.f32 %v1496, %v1554
        %v1587 = vsub.f32 %v1501, %v1555
        %v1588 = vsub.f32 %v1506, %v1556
        %v1589 = vsub.f32 %v1511, %v1557
        %v1590 = vsub.f32 %v1516, %v1558
        %v1591 = vsub.f32 %v1521, %v1559
        %v1592 = vsub.f32 %v1526, %v1560
        %v1593 = vsub.f32 %v1531, %v1561
        %v1594 = vsub.f32 %v1536, %v1562
        %v1595 = vsub.f32 %v1541, %v1563
        %v1596 = vsub.f32 %v1546, %v1564
        %v1597 = vmul.f32 %v1565, 1.442695
        %v1598 = vpow.pop %v1597
        %v1599 = vmul.f32 %v1566, 1.442695
        %v1600 = vpow.pop %v1599
        %v1601 = vmul.f32 %v1567, 1.442695
        %v1602 = vpow.pop %v1601
        %v1603 = vmul.f32 %v1568, 1.442695
        %v1604 = vpow.pop %v1603
        %v1605 = vmul.f32 %v1569, 1.442695
        %v1606 = vpow.pop %v1605
        %v1607 = vmul.f32 %v1570, 1.442695
        %v1608 = vpow.pop %v1607
        %v1609 = vmul.f32 %v1571, 1.442695
        %v1610 = vpow.pop %v1609
        %v1611 = vmul.f32 %v1572, 1.442695
        %v1612 = vpow.pop %v1611
        %v1613 = vmul.f32 %v1573, 1.442695
        %v1614 = vpow.pop %v1613
        %v1615 = vmul.f32 %v1574, 1.442695
        %v1616 = vpow.pop %v1615
        %v1617 = vmul.f32 %v1575, 1.442695
        %v1618 = vpow.pop %v1617
        %v1619 = vmul.f32 %v1576, 1.442695
        %v1620 = vpow.pop %v1619
        %v1621 = vmul.f32 %v1577, 1.442695
        %v1622 = vpow.pop %v1621
        %v1623 = vmul.f32 %v1578, 1.442695
        %v1624 = vpow.pop %v1623
        %v1625 = vmul.f32 %v1579, 1.442695
        %v1626 = vpow.pop %v1625
        %v1627 = vmul.f32 %v1580, 1.442695
        %v1628 = vpow.pop %v1627
        %v1629 = vmul.f32 %v1581, 1.442695
        %v1630 = vpow.pop %v1629
        %v1631 = vmul.f32 %v1582, 1.442695
        %v1632 = vpow.pop %v1631
        %v1633 = vmul.f32 %v1583, 1.442695
        %v1634 = vpow.pop %v1633
        %v1635 = vmul.f32 %v1584, 1.442695
        %v1636 = vpow.pop %v1635
        %v1637 = vmul.f32 %v1585, 1.442695
        %v1638 = vpow.pop %v1637
        %v1639 = vmul.f32 %v1586, 1.442695
        %v1640 = vpow.pop %v1639
        %v1641 = vmul.f32 %v1587, 1.442695
        %v1642 = vpow.pop %v1641
        %v1643 = vmul.f32 %v1588, 1.442695
        %v1644 = vpow.pop %v1643
        %v1645 = vmul.f32 %v1589, 1.442695
        %v1646 = vpow.pop %v1645
        %v1647 = vmul.f32 %v1590, 1.442695
        %v1648 = vpow.pop %v1647
        %v1649 = vmul.f32 %v1591, 1.442695
        %v1650 = vpow.pop %v1649
        %v1651 = vmul.f32 %v1592, 1.442695
        %v1652 = vpow.pop %v1651
        %v1653 = vmul.f32 %v1593, 1.442695
        %v1654 = vpow.pop %v1653
        %v1655 = vmul.f32 %v1594, 1.442695
        %v1656 = vpow.pop %v1655
        %v1657 = vmul.f32 %v1595, 1.442695
        %v1658 = vpow.pop %v1657
        %v1659 = vmul.f32 %v1596, 1.442695
        %v1660 = vpow.pop %v1659
        %v1661 = vadd.f32 %v1598, %v1630
        %v1662 = vadd.f32 %v1600, %v1632
        %v1663 = vadd.f32 %v1602, %v1634
        %v1664 = vadd.f32 %v1604, %v1636
        %v1665 = vadd.f32 %v1606, %v1638
        %v1666 = vadd.f32 %v1608, %v1640
        %v1667 = vadd.f32 %v1610, %v1642
        %v1668 = vadd.f32 %v1612, %v1644
        %v1669 = vadd.f32 %v1614, %v1646
        %v1670 = vadd.f32 %v1616, %v1648
        %v1671 = vadd.f32 %v1618, %v1650
        %v1672 = vadd.f32 %v1620, %v1652
        %v1673 = vadd.f32 %v1622, %v1654
        %v1674 = vadd.f32 %v1624, %v1656
        %v1675 = vadd.f32 %v1626, %v1658
        %v1676 = vadd.f32 %v1628, %v1660
        %v1677 = vrcp.pop %v1661
        %v1678 = vrcp.pop %v1662
        %v1679 = vrcp.pop %v1663
        %v1680 = vrcp.pop %v1664
        %v1681 = vrcp.pop %v1665
        %v1682 = vrcp.pop %v1666
        %v1683 = vrcp.pop %v1667
        %v1684 = vrcp.pop %v1668
        %v1685 = vrcp.pop %v1669
        %v1686 = vrcp.pop %v1670
        %v1687 = vrcp.pop %v1671
        %v1688 = vrcp.pop %v1672
        %v1689 = vrcp.pop %v1673
        %v1690 = vrcp.pop %v1674
        %v1691 = vrcp.pop %v1675
        %v1692 = vrcp.pop %v1676
        %v1693 = vmul.f32 %v1598, %v1677
        %v1694 = vmul.f32 %v1600, %v1678
        %v1695 = vmul.f32 %v1602, %v1679
        %v1696 = vmul.f32 %v1604, %v1680
        %v1697 = vmul.f32 %v1606, %v1681
        %v1698 = vmul.f32 %v1608, %v1682
        %v1699 = vmul.f32 %v1610, %v1683
        %v1700 = vmul.f32 %v1612, %v1684
        %v1701 = vmul.f32 %v1614, %v1685
        %v1702 = vmul.f32 %v1616, %v1686
        %v1703 = vmul.f32 %v1618, %v1687
        %v1704 = vmul.f32 %v1620, %v1688
        %v1705 = vmul.f32 %v1622, %v1689
        %v1706 = vmul.f32 %v1624, %v1690
        %v1707 = vmul.f32 %v1626, %v1691
        %v1708 = vmul.f32 %v1628, %v1692
        %v1709 = vmul.f32 %v1630, %v1677
        %v1710 = vmul.f32 %v1632, %v1678
        %v1711 = vmul.f32 %v1634, %v1679
        %v1712 = vmul.f32 %v1636, %v1680
        %v1713 = vmul.f32 %v1638, %v1681
        %v1714 = vmul.f32 %v1640, %v1682
        %v1715 = vmul.f32 %v1642, %v1683
        %v1716 = vmul.f32 %v1644, %v1684
        %v1717 = vmul.f32 %v1646, %v1685
        %v1718 = vmul.f32 %v1648, %v1686
        %v1719 = vmul.f32 %v1650, %v1687
        %v1720 = vmul.f32 %v1652, %v1688
        %v1721 = vmul.f32 %v1654, %v1689
        %v1722 = vmul.f32 %v1656, %v1690
        %v1723 = vmul.f32 %v1658, %v1691
        %v1724 = vmul.f32 %v1660, %v1692
        %1725 = vst [vmem:[%s548] sm:$0xff] %v1693
        %1726 = vst [vmem:[%s548 + $0x8] sm:$0xff] %v1694
        %1727 = vst [vmem:[%s548 + $0x10] sm:$0xff] %v1695
        %1728 = vst [vmem:[%s548 + $0x18] sm:$0xff] %v1696
        %1729 = vst [vmem:[%s548 + $0x20] sm:$0xff] %v1697
        %1730 = vst [vmem:[%s548 + $0x28] sm:$0xff] %v1698
        %1731 = vst [vmem:[%s548 + $0x30] sm:$0xff] %v1699
        %1732 = vst [vmem:[%s548 + $0x38] sm:$0xff] %v1700
        %1733 = vst [vmem:[%s548 + $0x40] sm:$0xff] %v1701
        %1734 = vst [vmem:[%s548 + $0x48] sm:$0xff] %v1702
        %1735 = vst [vmem:[%s548 + $0x50] sm:$0xff] %v1703
        %1736 = vst [vmem:[%s548 + $0x58] sm:$0xff] %v1704
        %1737 = vst [vmem:[%s548 + $0x60] sm:$0xff] %v1705
        %1738 = vst [vmem:[%s548 + $0x68] sm:$0xff] %v1706
        %1739 = vst [vmem:[%s548 + $0x70] sm:$0xff] %v1707
        %1740 = vst [vmem:[%s548 + $0x78] sm:$0xff] %v1708
        %1741 = vst [vmem:[%s548 + $0x80] sm:$0xff] %v1709
        %1742 = vst [vmem:[%s548 + $0x88] sm:$0xff] %v1710
        %1743 = vst [vmem:[%s548 + $0x90] sm:$0xff] %v1711
        %1744 = vst [vmem:[%s548 + $0x98] sm:$0xff] %v1712
        %1745 = vst [vmem:[%s548 + $0xa0] sm:$0xff] %v1713
        %1746 = vst [vmem:[%s548 + $0xa8] sm:$0xff] %v1714
        %1747 = vst [vmem:[%s548 + $0xb0] sm:$0xff] %v1715
        %1748 = vst [vmem:[%s548 + $0xb8] sm:$0xff] %v1716
        %1749 = vst [vmem:[%s548 + $0xc0] sm:$0xff] %v1717
        %1750 = vst [vmem:[%s548 + $0xc8] sm:$0xff] %v1718
        %1751 = vst [vmem:[%s548 + $0xd0] sm:$0xff] %v1719
        %1752 = vst [vmem:[%s548 + $0xd8] sm:$0xff] %v1720
        %1753 = vst [vmem:[%s548 + $0xe0] sm:$0xff] %v1721
        %1754 = vst [vmem:[%s548 + $0xe8] sm:$0xff] %v1722
        %1755 = vst [vmem:[%s548 + $0xf0] sm:$0xff] %v1723
        %1756 = vst [vmem:[%s548 + $0xf8] sm:$0xff] %v1724
        %s1757 = sand.u32 %s134, 1
        %s1758 = scalar_lea.sflag [#allocation5], %s1757
        %s1759 = sand.u32 %s134, 1
        %s1760 = smul.addr %s1759, 256
        %s1761 = scalar_lea.vmem [#allocation4], %s1760
        // Predicated region
        $region113: #{model_forward.1} parent=103 // pred_check
          %p1762 = pneg %p144
        $region114: #{model_forward.1} parent=103 // pred_check_branch
          %1764 = sbr.rel (%p1762) target = $region116
        $region115: #{model_forward.1} parent=103 // pred_region
          #allocation7 [shape = 'u32[6]{0}', space=smem, size = 0x18, scoped, tag = 'DMA stride descriptor']
          %s1765 = smul.u32 16, %s22
          %s1767 = ssub.s32 4096, 4096
          %1768 = vsyncadd %s1758, %s1767
          %s1769 = smul.addr %s1765, 2
          %s1770 = sadd.s32 %s23, %s1769
          %s1771 = smul.addr %s1770, 128
          %s1772 = scalar_lea.hbm %s4, %s1771
          %s1774 = sshll.u32 1, 14
          %s1775 = sxor.u32 4294967295, %s1774
          %s1778 = sshll.u32 7, 18
          %s1779 = sxor.u32 4294967295, %s1778
          %s1780 = sand.u32 0, %s1779
          %s1782 = sor.u32 %s1780, 0
          %s1783 = sshll.u32 %s1761, 4
          %s1784 = int_to_ptr.vmem [resolvable:$true] %s1783
          %1790 = sst [smem:[#allocation7]] 2048
          %s1791 = scalar_lea.smem [#allocation7], 1
          %1792 = sst [smem:[%s1791]] 8192
          %s1793 = scalar_lea.smem [#allocation7], 2
          %1794 = sst [smem:[%s1793]] 16
          %s1795 = scalar_lea.smem [#allocation7], 3
          %1796 = sst [smem:[%s1795]] 128
          %s1797 = scalar_lea.smem [#allocation7], 4
          %1798 = sst [smem:[%s1797]] 256
          %s1799 = scalar_lea.smem [#allocation7], 5
          %1800 = sst [smem:[%s1799]] 8
          %1802 = dma.general %s1784, 4096, %s1772, %s1758, 131072, [#allocation7], %s1782, 0
        $region116: #{model_forward.1} parent=103 // pred_fallthru
          _
      $region104: #{model_forward.1} parent=5 // pred_fallthru
        _
      %p1803 = scmp.le.s32.totalorder 2, %s13
      // Predicated region
      $region117: #{model_forward.1} parent=5 // pred_check
        %p1804 = pneg %p1803
      $region118: #{model_forward.1} parent=5 // pred_check_branch
        %1806 = sbr.rel (%p1804) target = $region120
      $region119: #{model_forward.1} parent=5 // pred_region
        %s1807 = ssub.s32 %s13, 2
        // Predicated region
        $region121: #{model_forward.1} parent=119 // pred_check
          %p1808 = pneg %p150
        $region122: #{model_forward.1} parent=119 // pred_check_branch
          %1810 = sbr.rel (%p1808) target = $region124
        $region123: #{model_forward.1} parent=119 // pred_region
          %s1811 = sand.u32 %s135, 1
          %s1812 = scalar_lea.sflag [#allocation5], %s1811
          %s1813 = sand.u32 %s135, 1
          %s1814 = smul.addr %s1813, 256
          %s1815 = scalar_lea.vmem [#allocation4], %s1814
          %1816 = dma.done %s1812, 4096
        $region124: #{model_forward.1} parent=119 // pred_fallthru
          _
      $region120: #{model_forward.1} parent=5 // pred_fallthru
        _
    $region6: #{model_forward.1} parent=1 // loop_footer
      %s17 = sadd.s32 1, %s13
    $region7: #{model_forward.1} parent=1 // loop_footer_branch
      %12 = sbr.rel target = $region3
    $region8: #{model_forward.1} parent=1 // loop_exit
      _
    %1817 = vsyncpa [#allocation5], 1
    %s1818 = scalar_lea.sflag [#allocation5], 1
    %1819 = vsyncpa %s1818, 1

</llo_original>
